<compile_context>
chip_gen: v7x
topology: tpu7x:2x2x1
jax: 0.10.0
libtpu: 0.0.40
codegen_flags: <defaults>
</compile_context>

<pallas_src>
import jax
import jax.numpy as jnp
from jax.experimental import pallas as pl
from jax.experimental.pallas import tpu as pltpu

LANE = 128
SUBLANE = 8
_GATE_PERM = (0, 1, 3, 2)   # PyTorch gate order [i, f, g, o] -> kernel [i, f, o, g]


def _round_up(x, m):
    return ((x + m - 1) // m) * m


def _lstm_classifier_kernel(tok_ref, embwih_ref, whh_ref, b_ref,
                            wout_ref, bout_ref, out_ref):
    """tok_ref:    (T*Bp, 1) int32  time-major token ids, batch padded to Bp
       embwih_ref: (Vp, 4Hp) bf16   frozen-embedding @ W_ih^T, gates [i|f|o|g]
       whh_ref:    (Hp, 4Hp) bf16   W_hh^T, gate-padded / reordered
       b_ref:      (1, 4Hp)  f32    b_ih + b_hh, gate-padded / reordered
       wout_ref:   (Hp, Lp)  bf16   W_out^T, padded
       bout_ref:   (1, Lp)   f32
       out_ref:    (Bp, Lp)  f32    padded logits (rows >= B are don't-care)."""
    TBp = tok_ref.shape[0]
    Bp, _ = out_ref.shape
    Vp = embwih_ref.shape[0]
    Hp = whh_ref.shape[0]
    T = TBp // Bp

    # Fused embedding lookup + hoisted input projection: one-hot(ids) selects
    # rows of (emb @ W_ih^T) in a single MXU pass for ALL timesteps.
    eq = tok_ref[...] == jax.lax.broadcasted_iota(jnp.int32, (TBp, Vp), 1)
    onehot = jnp.where(eq, 1.0, 0.0).astype(jnp.bfloat16)          # (T*Bp, Vp)
    gx = (jnp.dot(onehot, embwih_ref[...],
                  preferred_element_type=jnp.float32)
          + b_ref[...])                                            # (T*Bp, 4Hp) f32

    h = jnp.zeros((Bp, Hp), jnp.float32)
    c = jnp.zeros((Bp, Hp), jnp.float32)

    # Static full unroll over the recurrence (T small & known).  W_hh is read
    # from VMEM at its use site each step (cheap vlds) instead of being held
    # live as ~32 bf16 vregs across the whole unroll.
    # TODO(synk): hold W_hh in MXU staging via pltpu.matmul_push_rhs /
    # matmul_acc_lhs / matmul_pop (RHS constant over all T steps) once that
    # explicit-MXU path is validated for a 512-wide RHS.
    for t in range(T):
        gates = gx[t * Bp:(t + 1) * Bp, :] + jnp.dot(
            h.astype(jnp.bfloat16), whh_ref[...],
            preferred_element_type=jnp.float32)                    # (Bp, 4Hp) f32
        # Gate order [i|f|o|g]: one sigmoid covers i,f,o; one tanh covers g.
        sig = jax.nn.sigmoid(gates[:, :3 * Hp])
        i_g = sig[:, 0 * Hp:1 * Hp]
        f_g = sig[:, 1 * Hp:2 * Hp]
        o_g = sig[:, 2 * Hp:3 * Hp]
        g_g = jnp.tanh(gates[:, 3 * Hp:])
        c = f_g * c + i_g * g_g
        h = o_g * jnp.tanh(c)

    # Final linear on the last-step hidden state (lane-dense Lp-wide store).
    out_ref[...] = (jnp.dot(h.astype(jnp.bfloat16), wout_ref[...],
                            preferred_element_type=jnp.float32)
                    + bout_ref[...])


def _prepare_params(embeddings, w_ih, w_hh, b_ih, b_hh, w_lin, b_lin):
    """One-time weight prep (cached): gate reorder/pad, transposes, bf16 casts,
    bias fold, and folding the frozen embedding table into W_ih."""
    V, _E = embeddings.shape
    H = w_hh.shape[1]
    L = w_lin.shape[0]
    Hp = _round_up(H, LANE)
    Lp = _round_up(L, LANE)
    Vp = _round_up(V, LANE)

    def pad_gates(w_t):  # (rows, 4H) -> (rows, 4Hp), gate order [i|f|o|g]
        gates = jnp.split(w_t, 4, axis=1)
        gates = [gates[k] for k in _GATE_PERM]
        return jnp.concatenate(
            [jnp.pad(g, ((0, 0), (0, Hp - H))) for g in gates], axis=1)

    wih_t = pad_gates(jnp.asarray(w_ih, jnp.float32).T)               # (E, 4Hp)
    emb_p = jnp.pad(jnp.asarray(embeddings, jnp.float32),
                    ((0, Vp - V), (0, 0)))                            # (Vp, E)
    # Frozen embedding (padding_idx only affects grads, i.e. a no-op here) ->
    # fold the table into the input projection once.
    embwih = (emb_p @ wih_t).astype(jnp.bfloat16)                     # (Vp, 4Hp)

    whh = jnp.pad(pad_gates(jnp.asarray(w_hh, jnp.float32).T),
                  ((0, Hp - H), (0, 0))).astype(jnp.bfloat16)         # (Hp, 4Hp)
    b = pad_gates((jnp.asarray(b_ih, jnp.float32)
                   + jnp.asarray(b_hh, jnp.float32))[None, :])        # (1, 4Hp) f32
    wout = jnp.pad(jnp.asarray(w_lin, jnp.float32).T,
                   ((0, Hp - H), (0, Lp - L))).astype(jnp.bfloat16)   # (Hp, Lp)
    bout = jnp.pad(jnp.asarray(b_lin, jnp.float32)[None, :],
                   ((0, 0), (0, Lp - L)))                             # (1, Lp) f32

    params = dict(embwih=embwih, whh=whh, b=b, wout=wout, bout=bout)
    return params, L, Lp


def make_downstream_classifier(embeddings, w_ih, w_hh, b_ih, b_hh, w_lin, b_lin):
    """Returns a jitted forward(sentences) -> (B, num_labels) float32 logits."""
    params, L, Lp = _prepare_params(embeddings, w_ih, w_hh, b_ih, b_hh,
                                    w_lin, b_lin)

    @jax.jit
    def forward(sentences):
        B, T = sentences.shape
        Bp = _round_up(max(B, SUBLANE), SUBLANE)
        # time-major token ids, batch padded to a full sublane tile
        tok = jnp.pad(jnp.transpose(sentences.astype(jnp.int32)),
                      ((0, 0), (0, Bp - B)))                          # (T, Bp)
        tok = tok.reshape(T * Bp, 1)

        vmem = pl.BlockSpec(memory_space=pltpu.MemorySpace.VMEM)
        logits_p = pl.pallas_call(
            _lstm_classifier_kernel,
            out_shape=jax.ShapeDtypeStruct((Bp, Lp), jnp.float32),
            in_specs=[vmem] * 6,
            out_specs=vmem,
        )(tok, params["embwih"], params["whh"], params["b"],
          params["wout"], params["bout"])

        # TODO(synk): at larger B/T add a batch grid with
        # dimension_semantics=("parallel",) and tile the time axis; size the
        # per-block gx/state for v7x's 64 MiB VMEM (~32 MiB scoped, 2 TCs)
        # rather than reusing a v5e/v6e-sized block.
        return logits_p[:B, :L]

    return forward


def _reference_forward(sentences, embeddings, w_ih, w_hh, b_ih, b_hh,
                       w_lin, b_lin):
    """Pure-JAX f32 reference matching the PyTorch module."""
    B, T = sentences.shape
    H = w_hh.shape[1]
    embeds = jnp.take(embeddings, sentences, axis=0)                  # (B, T, E)
    h = jnp.zeros((B, H), jnp.float32)
    c = jnp.zeros((B, H), jnp.float32)
    for t in range(T):
        gates = embeds[:, t, :] @ w_ih.T + h @ w_hh.T + b_ih + b_hh
        i_g = jax.nn.sigmoid(gates[:, 0 * H:1 * H])
        f_g = jax.nn.sigmoid(gates[:, 1 * H:2 * H])
        g_g = jnp.tanh(gates[:, 2 * H:3 * H])
        o_g = jax.nn.sigmoid(gates[:, 3 * H:4 * H])
        c = f_g * c + i_g * g_g
        h = o_g * jnp.tanh(c)
    return h @ w_lin.T + b_lin


if __name__ == "__main__":
    # small shapes consistent with the module's forward
    batch, seq_len = 2, 8
    vocab_size, embedding_dim, hidden_dim, num_labels = 20, 16, 32, 4

    key = jax.random.PRNGKey(0)
    k_emb, k_wih, k_whh, k_bih, k_bhh, k_wl, k_bl, k_tok = jax.random.split(key, 8)

    embeddings = jax.random.normal(k_emb, (vocab_size, embedding_dim), jnp.float32) * 0.1
    w_ih = jax.random.normal(k_wih, (4 * hidden_dim, embedding_dim), jnp.float32) * 0.1
    w_hh = jax.random.normal(k_whh, (4 * hidden_dim, hidden_dim), jnp.float32) * 0.1
    b_ih = jax.random.normal(k_bih, (4 * hidden_dim,), jnp.float32) * 0.1
    b_hh = jax.random.normal(k_bhh, (4 * hidden_dim,), jnp.float32) * 0.1
    w_lin = jax.random.normal(k_wl, (num_labels, hidden_dim), jnp.float32) * 0.1
    b_lin = jax.random.normal(k_bl, (num_labels,), jnp.float32) * 0.1

    sentences = jax.random.randint(k_tok, (batch, seq_len), 0, vocab_size, jnp.int32)

    forward = make_downstream_classifier(
        embeddings, w_ih, w_hh, b_ih, b_hh, w_lin, b_lin)
    logits = forward(sentences)
    jax.block_until_ready(logits)
    assert logits.shape == (batch, num_labels)

    ref = _reference_forward(
        sentences, embeddings, w_ih, w_hh, b_ih, b_hh, w_lin, b_lin)
    assert jnp.allclose(logits, ref, atol=2e-2, rtol=2e-2), (
        f"max abs err {jnp.max(jnp.abs(logits - ref))}")

    print("KERNEL_OK")
</pallas_src>

<mosaic_0001>
module attributes {stable_mosaic.version = 11 : i64} {
  func.func @_lstm_classifier_kernel(%arg0: memref<64x1xi32, #tpu.memory_space<vmem>>, %arg1: memref<128x512xbf16, #tpu.memory_space<vmem>>, %arg2: memref<128x512xbf16, #tpu.memory_space<vmem>>, %arg3: memref<1x512xf32, #tpu.memory_space<vmem>>, %arg4: memref<128x128xbf16, #tpu.memory_space<vmem>>, %arg5: memref<1x128xf32, #tpu.memory_space<vmem>>, %arg6: memref<8x128xf32, #tpu.memory_space<vmem>>) attributes {dimension_semantics = [], scalar_prefetch = 0 : i64, scratch_operands = 0 : i64, tpu.core_type = #tpu.core_type<tc>} {
    %c0 = arith.constant 0 : index
    %c0_0 = arith.constant 0 : index
    %0 = vector.load %arg0[%c0, %c0_0] : memref<64x1xi32, #tpu.memory_space<vmem>>, vector<64x1xi32>
    %1 = tpu.iota {dimensions = array<i32: 1>} : vector<64x128xi32>
    %2 = vector.broadcast %0 : vector<64x1xi32> to vector<64x128xi32>
    %3 = arith.cmpi eq, %2, %1 : vector<64x128xi32>
    %cst = arith.constant 1.000000e+00 : f32
    %cst_1 = arith.constant 0.000000e+00 : f32
    %4 = vector.broadcast %cst : f32 to vector<64x128xf32>
    %5 = vector.broadcast %cst_1 : f32 to vector<64x128xf32>
    %6 = arith.select %3, %4, %5 : vector<64x128xi1>, vector<64x128xf32>
    %7 = arith.truncf %6 : vector<64x128xf32> to vector<64x128xbf16>
    %c0_2 = arith.constant 0 : index
    %c0_3 = arith.constant 0 : index
    %8 = vector.load %arg1[%c0_2, %c0_3] : memref<128x512xbf16, #tpu.memory_space<vmem>>, vector<128x512xbf16>
    %cst_4 = arith.constant dense<0.000000e+00> : vector<64x512xf32>
    %9 = tpu.matmul %7, %8, %cst_4 {dimension_numbers = #tpu.dot_dimension_numbers<[1], [0], [0], [1], [0, 0, 1, 1], [], []>} : vector<64x128xbf16>, vector<128x512xbf16>, vector<64x512xf32> -> vector<64x512xf32>
    %c0_5 = arith.constant 0 : index
    %c0_6 = arith.constant 0 : index
    %10 = vector.load %arg3[%c0_5, %c0_6] : memref<1x512xf32, #tpu.memory_space<vmem>>, vector<1x512xf32>
    %11 = vector.broadcast %10 : vector<1x512xf32> to vector<64x512xf32>
    %12 = arith.addf %9, %11 : vector<64x512xf32>
    %cst_7 = arith.constant 0.000000e+00 : f32
    %13 = vector.broadcast %cst_7 : f32 to vector<8x128xf32>
    %cst_8 = arith.constant 0.000000e+00 : f32
    %14 = vector.broadcast %cst_8 : f32 to vector<8x128xf32>
    %15 = vector.extract_strided_slice %12 {offsets = [0, 0], sizes = [8, 512], strides = [1, 1]} : vector<64x512xf32> to vector<8x512xf32>
    %16 = arith.truncf %13 : vector<8x128xf32> to vector<8x128xbf16>
    %c0_9 = arith.constant 0 : index
    %c0_10 = arith.constant 0 : index
    %17 = vector.load %arg2[%c0_9, %c0_10] : memref<128x512xbf16, #tpu.memory_space<vmem>>, vector<128x512xbf16>
    %cst_11 = arith.constant dense<0.000000e+00> : vector<8x512xf32>
    %18 = tpu.matmul %16, %17, %cst_11 {dimension_numbers = #tpu.dot_dimension_numbers<[1], [0], [0], [1], [0, 0, 1, 1], [], []>} : vector<8x128xbf16>, vector<128x512xbf16>, vector<8x512xf32> -> vector<8x512xf32>
    %19 = arith.addf %15, %18 : vector<8x512xf32>
    %20 = vector.extract_strided_slice %19 {offsets = [0, 0], sizes = [8, 384], strides = [1, 1]} : vector<8x512xf32> to vector<8x384xf32>
    %21 = arith.negf %20 : vector<8x384xf32>
    %22 = math.exp %21 : vector<8x384xf32>
    %cst_12 = arith.constant 1.000000e+00 : f32
    %23 = vector.broadcast %cst_12 : f32 to vector<8x384xf32>
    %24 = arith.addf %23, %22 : vector<8x384xf32>
    %25 = arith.divf %23, %24 : vector<8x384xf32>
    %26 = vector.extract_strided_slice %25 {offsets = [0, 0], sizes = [8, 128], strides = [1, 1]} : vector<8x384xf32> to vector<8x128xf32>
    %27 = vector.extract_strided_slice %25 {offsets = [0, 128], sizes = [8, 128], strides = [1, 1]} : vector<8x384xf32> to vector<8x128xf32>
    %28 = vector.extract_strided_slice %25 {offsets = [0, 256], sizes = [8, 128], strides = [1, 1]} : vector<8x384xf32> to vector<8x128xf32>
    %29 = vector.extract_strided_slice %19 {offsets = [0, 384], sizes = [8, 128], strides = [1, 1]} : vector<8x512xf32> to vector<8x128xf32>
    %30 = math.tanh %29 : vector<8x128xf32>
    %31 = arith.mulf %27, %14 : vector<8x128xf32>
    %32 = arith.mulf %26, %30 : vector<8x128xf32>
    %33 = arith.addf %31, %32 : vector<8x128xf32>
    %34 = math.tanh %33 : vector<8x128xf32>
    %35 = arith.mulf %28, %34 : vector<8x128xf32>
    %36 = vector.extract_strided_slice %12 {offsets = [8, 0], sizes = [8, 512], strides = [1, 1]} : vector<64x512xf32> to vector<8x512xf32>
    %37 = arith.truncf %35 : vector<8x128xf32> to vector<8x128xbf16>
    %c0_13 = arith.constant 0 : index
    %c0_14 = arith.constant 0 : index
    %38 = vector.load %arg2[%c0_13, %c0_14] : memref<128x512xbf16, #tpu.memory_space<vmem>>, vector<128x512xbf16>
    %cst_15 = arith.constant dense<0.000000e+00> : vector<8x512xf32>
    %39 = tpu.matmul %37, %38, %cst_15 {dimension_numbers = #tpu.dot_dimension_numbers<[1], [0], [0], [1], [0, 0, 1, 1], [], []>} : vector<8x128xbf16>, vector<128x512xbf16>, vector<8x512xf32> -> vector<8x512xf32>
    %40 = arith.addf %36, %39 : vector<8x512xf32>
    %41 = vector.extract_strided_slice %40 {offsets = [0, 0], sizes = [8, 384], strides = [1, 1]} : vector<8x512xf32> to vector<8x384xf32>
    %42 = arith.negf %41 : vector<8x384xf32>
    %43 = math.exp %42 : vector<8x384xf32>
    %cst_16 = arith.constant 1.000000e+00 : f32
    %44 = vector.broadcast %cst_16 : f32 to vector<8x384xf32>
    %45 = arith.addf %44, %43 : vector<8x384xf32>
    %46 = arith.divf %44, %45 : vector<8x384xf32>
    %47 = vector.extract_strided_slice %46 {offsets = [0, 0], sizes = [8, 128], strides = [1, 1]} : vector<8x384xf32> to vector<8x128xf32>
    %48 = vector.extract_strided_slice %46 {offsets = [0, 128], sizes = [8, 128], strides = [1, 1]} : vector<8x384xf32> to vector<8x128xf32>
    %49 = vector.extract_strided_slice %46 {offsets = [0, 256], sizes = [8, 128], strides = [1, 1]} : vector<8x384xf32> to vector<8x128xf32>
    %50 = vector.extract_strided_slice %40 {offsets = [0, 384], sizes = [8, 128], strides = [1, 1]} : vector<8x512xf32> to vector<8x128xf32>
    %51 = math.tanh %50 : vector<8x128xf32>
    %52 = arith.mulf %48, %33 : vector<8x128xf32>
    %53 = arith.mulf %47, %51 : vector<8x128xf32>
    %54 = arith.addf %52, %53 : vector<8x128xf32>
    %55 = math.tanh %54 : vector<8x128xf32>
    %56 = arith.mulf %49, %55 : vector<8x128xf32>
    %57 = vector.extract_strided_slice %12 {offsets = [16, 0], sizes = [8, 512], strides = [1, 1]} : vector<64x512xf32> to vector<8x512xf32>
    %58 = arith.truncf %56 : vector<8x128xf32> to vector<8x128xbf16>
    %c0_17 = arith.constant 0 : index
    %c0_18 = arith.constant 0 : index
    %59 = vector.load %arg2[%c0_17, %c0_18] : memref<128x512xbf16, #tpu.memory_space<vmem>>, vector<128x512xbf16>
    %cst_19 = arith.constant dense<0.000000e+00> : vector<8x512xf32>
    %60 = tpu.matmul %58, %59, %cst_19 {dimension_numbers = #tpu.dot_dimension_numbers<[1], [0], [0], [1], [0, 0, 1, 1], [], []>} : vector<8x128xbf16>, vector<128x512xbf16>, vector<8x512xf32> -> vector<8x512xf32>
    %61 = arith.addf %57, %60 : vector<8x512xf32>
    %62 = vector.extract_strided_slice %61 {offsets = [0, 0], sizes = [8, 384], strides = [1, 1]} : vector<8x512xf32> to vector<8x384xf32>
    %63 = arith.negf %62 : vector<8x384xf32>
    %64 = math.exp %63 : vector<8x384xf32>
    %cst_20 = arith.constant 1.000000e+00 : f32
    %65 = vector.broadcast %cst_20 : f32 to vector<8x384xf32>
    %66 = arith.addf %65, %64 : vector<8x384xf32>
    %67 = arith.divf %65, %66 : vector<8x384xf32>
    %68 = vector.extract_strided_slice %67 {offsets = [0, 0], sizes = [8, 128], strides = [1, 1]} : vector<8x384xf32> to vector<8x128xf32>
    %69 = vector.extract_strided_slice %67 {offsets = [0, 128], sizes = [8, 128], strides = [1, 1]} : vector<8x384xf32> to vector<8x128xf32>
    %70 = vector.extract_strided_slice %67 {offsets = [0, 256], sizes = [8, 128], strides = [1, 1]} : vector<8x384xf32> to vector<8x128xf32>
    %71 = vector.extract_strided_slice %61 {offsets = [0, 384], sizes = [8, 128], strides = [1, 1]} : vector<8x512xf32> to vector<8x128xf32>
    %72 = math.tanh %71 : vector<8x128xf32>
    %73 = arith.mulf %69, %54 : vector<8x128xf32>
    %74 = arith.mulf %68, %72 : vector<8x128xf32>
    %75 = arith.addf %73, %74 : vector<8x128xf32>
    %76 = math.tanh %75 : vector<8x128xf32>
    %77 = arith.mulf %70, %76 : vector<8x128xf32>
    %78 = vector.extract_strided_slice %12 {offsets = [24, 0], sizes = [8, 512], strides = [1, 1]} : vector<64x512xf32> to vector<8x512xf32>
    %79 = arith.truncf %77 : vector<8x128xf32> to vector<8x128xbf16>
    %c0_21 = arith.constant 0 : index
    %c0_22 = arith.constant 0 : index
    %80 = vector.load %arg2[%c0_21, %c0_22] : memref<128x512xbf16, #tpu.memory_space<vmem>>, vector<128x512xbf16>
    %cst_23 = arith.constant dense<0.000000e+00> : vector<8x512xf32>
    %81 = tpu.matmul %79, %80, %cst_23 {dimension_numbers = #tpu.dot_dimension_numbers<[1], [0], [0], [1], [0, 0, 1, 1], [], []>} : vector<8x128xbf16>, vector<128x512xbf16>, vector<8x512xf32> -> vector<8x512xf32>
    %82 = arith.addf %78, %81 : vector<8x512xf32>
    %83 = vector.extract_strided_slice %82 {offsets = [0, 0], sizes = [8, 384], strides = [1, 1]} : vector<8x512xf32> to vector<8x384xf32>
    %84 = arith.negf %83 : vector<8x384xf32>
    %85 = math.exp %84 : vector<8x384xf32>
    %cst_24 = arith.constant 1.000000e+00 : f32
    %86 = vector.broadcast %cst_24 : f32 to vector<8x384xf32>
    %87 = arith.addf %86, %85 : vector<8x384xf32>
    %88 = arith.divf %86, %87 : vector<8x384xf32>
    %89 = vector.extract_strided_slice %88 {offsets = [0, 0], sizes = [8, 128], strides = [1, 1]} : vector<8x384xf32> to vector<8x128xf32>
    %90 = vector.extract_strided_slice %88 {offsets = [0, 128], sizes = [8, 128], strides = [1, 1]} : vector<8x384xf32> to vector<8x128xf32>
    %91 = vector.extract_strided_slice %88 {offsets = [0, 256], sizes = [8, 128], strides = [1, 1]} : vector<8x384xf32> to vector<8x128xf32>
    %92 = vector.extract_strided_slice %82 {offsets = [0, 384], sizes = [8, 128], strides = [1, 1]} : vector<8x512xf32> to vector<8x128xf32>
    %93 = math.tanh %92 : vector<8x128xf32>
    %94 = arith.mulf %90, %75 : vector<8x128xf32>
    %95 = arith.mulf %89, %93 : vector<8x128xf32>
    %96 = arith.addf %94, %95 : vector<8x128xf32>
    %97 = math.tanh %96 : vector<8x128xf32>
    %98 = arith.mulf %91, %97 : vector<8x128xf32>
    %99 = vector.extract_strided_slice %12 {offsets = [32, 0], sizes = [8, 512], strides = [1, 1]} : vector<64x512xf32> to vector<8x512xf32>
    %100 = arith.truncf %98 : vector<8x128xf32> to vector<8x128xbf16>
    %c0_25 = arith.constant 0 : index
    %c0_26 = arith.constant 0 : index
    %101 = vector.load %arg2[%c0_25, %c0_26] : memref<128x512xbf16, #tpu.memory_space<vmem>>, vector<128x512xbf16>
    %cst_27 = arith.constant dense<0.000000e+00> : vector<8x512xf32>
    %102 = tpu.matmul %100, %101, %cst_27 {dimension_numbers = #tpu.dot_dimension_numbers<[1], [0], [0], [1], [0, 0, 1, 1], [], []>} : vector<8x128xbf16>, vector<128x512xbf16>, vector<8x512xf32> -> vector<8x512xf32>
    %103 = arith.addf %99, %102 : vector<8x512xf32>
    %104 = vector.extract_strided_slice %103 {offsets = [0, 0], sizes = [8, 384], strides = [1, 1]} : vector<8x512xf32> to vector<8x384xf32>
    %105 = arith.negf %104 : vector<8x384xf32>
    %106 = math.exp %105 : vector<8x384xf32>
    %cst_28 = arith.constant 1.000000e+00 : f32
    %107 = vector.broadcast %cst_28 : f32 to vector<8x384xf32>
    %108 = arith.addf %107, %106 : vector<8x384xf32>
    %109 = arith.divf %107, %108 : vector<8x384xf32>
    %110 = vector.extract_strided_slice %109 {offsets = [0, 0], sizes = [8, 128], strides = [1, 1]} : vector<8x384xf32> to vector<8x128xf32>
    %111 = vector.extract_strided_slice %109 {offsets = [0, 128], sizes = [8, 128], strides = [1, 1]} : vector<8x384xf32> to vector<8x128xf32>
    %112 = vector.extract_strided_slice %109 {offsets = [0, 256], sizes = [8, 128], strides = [1, 1]} : vector<8x384xf32> to vector<8x128xf32>
    %113 = vector.extract_strided_slice %103 {offsets = [0, 384], sizes = [8, 128], strides = [1, 1]} : vector<8x512xf32> to vector<8x128xf32>
    %114 = math.tanh %113 : vector<8x128xf32>
    %115 = arith.mulf %111, %96 : vector<8x128xf32>
    %116 = arith.mulf %110, %114 : vector<8x128xf32>
    %117 = arith.addf %115, %116 : vector<8x128xf32>
    %118 = math.tanh %117 : vector<8x128xf32>
    %119 = arith.mulf %112, %118 : vector<8x128xf32>
    %120 = vector.extract_strided_slice %12 {offsets = [40, 0], sizes = [8, 512], strides = [1, 1]} : vector<64x512xf32> to vector<8x512xf32>
    %121 = arith.truncf %119 : vector<8x128xf32> to vector<8x128xbf16>
    %c0_29 = arith.constant 0 : index
    %c0_30 = arith.constant 0 : index
    %122 = vector.load %arg2[%c0_29, %c0_30] : memref<128x512xbf16, #tpu.memory_space<vmem>>, vector<128x512xbf16>
    %cst_31 = arith.constant dense<0.000000e+00> : vector<8x512xf32>
    %123 = tpu.matmul %121, %122, %cst_31 {dimension_numbers = #tpu.dot_dimension_numbers<[1], [0], [0], [1], [0, 0, 1, 1], [], []>} : vector<8x128xbf16>, vector<128x512xbf16>, vector<8x512xf32> -> vector<8x512xf32>
    %124 = arith.addf %120, %123 : vector<8x512xf32>
    %125 = vector.extract_strided_slice %124 {offsets = [0, 0], sizes = [8, 384], strides = [1, 1]} : vector<8x512xf32> to vector<8x384xf32>
    %126 = arith.negf %125 : vector<8x384xf32>
    %127 = math.exp %126 : vector<8x384xf32>
    %cst_32 = arith.constant 1.000000e+00 : f32
    %128 = vector.broadcast %cst_32 : f32 to vector<8x384xf32>
    %129 = arith.addf %128, %127 : vector<8x384xf32>
    %130 = arith.divf %128, %129 : vector<8x384xf32>
    %131 = vector.extract_strided_slice %130 {offsets = [0, 0], sizes = [8, 128], strides = [1, 1]} : vector<8x384xf32> to vector<8x128xf32>
    %132 = vector.extract_strided_slice %130 {offsets = [0, 128], sizes = [8, 128], strides = [1, 1]} : vector<8x384xf32> to vector<8x128xf32>
    %133 = vector.extract_strided_slice %130 {offsets = [0, 256], sizes = [8, 128], strides = [1, 1]} : vector<8x384xf32> to vector<8x128xf32>
    %134 = vector.extract_strided_slice %124 {offsets = [0, 384], sizes = [8, 128], strides = [1, 1]} : vector<8x512xf32> to vector<8x128xf32>
    %135 = math.tanh %134 : vector<8x128xf32>
    %136 = arith.mulf %132, %117 : vector<8x128xf32>
    %137 = arith.mulf %131, %135 : vector<8x128xf32>
    %138 = arith.addf %136, %137 : vector<8x128xf32>
    %139 = math.tanh %138 : vector<8x128xf32>
    %140 = arith.mulf %133, %139 : vector<8x128xf32>
    %141 = vector.extract_strided_slice %12 {offsets = [48, 0], sizes = [8, 512], strides = [1, 1]} : vector<64x512xf32> to vector<8x512xf32>
    %142 = arith.truncf %140 : vector<8x128xf32> to vector<8x128xbf16>
    %c0_33 = arith.constant 0 : index
    %c0_34 = arith.constant 0 : index
    %143 = vector.load %arg2[%c0_33, %c0_34] : memref<128x512xbf16, #tpu.memory_space<vmem>>, vector<128x512xbf16>
    %cst_35 = arith.constant dense<0.000000e+00> : vector<8x512xf32>
    %144 = tpu.matmul %142, %143, %cst_35 {dimension_numbers = #tpu.dot_dimension_numbers<[1], [0], [0], [1], [0, 0, 1, 1], [], []>} : vector<8x128xbf16>, vector<128x512xbf16>, vector<8x512xf32> -> vector<8x512xf32>
    %145 = arith.addf %141, %144 : vector<8x512xf32>
    %146 = vector.extract_strided_slice %145 {offsets = [0, 0], sizes = [8, 384], strides = [1, 1]} : vector<8x512xf32> to vector<8x384xf32>
    %147 = arith.negf %146 : vector<8x384xf32>
    %148 = math.exp %147 : vector<8x384xf32>
    %cst_36 = arith.constant 1.000000e+00 : f32
    %149 = vector.broadcast %cst_36 : f32 to vector<8x384xf32>
    %150 = arith.addf %149, %148 : vector<8x384xf32>
    %151 = arith.divf %149, %150 : vector<8x384xf32>
    %152 = vector.extract_strided_slice %151 {offsets = [0, 0], sizes = [8, 128], strides = [1, 1]} : vector<8x384xf32> to vector<8x128xf32>
    %153 = vector.extract_strided_slice %151 {offsets = [0, 128], sizes = [8, 128], strides = [1, 1]} : vector<8x384xf32> to vector<8x128xf32>
    %154 = vector.extract_strided_slice %151 {offsets = [0, 256], sizes = [8, 128], strides = [1, 1]} : vector<8x384xf32> to vector<8x128xf32>
    %155 = vector.extract_strided_slice %145 {offsets = [0, 384], sizes = [8, 128], strides = [1, 1]} : vector<8x512xf32> to vector<8x128xf32>
    %156 = math.tanh %155 : vector<8x128xf32>
    %157 = arith.mulf %153, %138 : vector<8x128xf32>
    %158 = arith.mulf %152, %156 : vector<8x128xf32>
    %159 = arith.addf %157, %158 : vector<8x128xf32>
    %160 = math.tanh %159 : vector<8x128xf32>
    %161 = arith.mulf %154, %160 : vector<8x128xf32>
    %162 = vector.extract_strided_slice %12 {offsets = [56, 0], sizes = [8, 512], strides = [1, 1]} : vector<64x512xf32> to vector<8x512xf32>
    %163 = arith.truncf %161 : vector<8x128xf32> to vector<8x128xbf16>
    %c0_37 = arith.constant 0 : index
    %c0_38 = arith.constant 0 : index
    %164 = vector.load %arg2[%c0_37, %c0_38] : memref<128x512xbf16, #tpu.memory_space<vmem>>, vector<128x512xbf16>
    %cst_39 = arith.constant dense<0.000000e+00> : vector<8x512xf32>
    %165 = tpu.matmul %163, %164, %cst_39 {dimension_numbers = #tpu.dot_dimension_numbers<[1], [0], [0], [1], [0, 0, 1, 1], [], []>} : vector<8x128xbf16>, vector<128x512xbf16>, vector<8x512xf32> -> vector<8x512xf32>
    %166 = arith.addf %162, %165 : vector<8x512xf32>
    %167 = vector.extract_strided_slice %166 {offsets = [0, 0], sizes = [8, 384], strides = [1, 1]} : vector<8x512xf32> to vector<8x384xf32>
    %168 = arith.negf %167 : vector<8x384xf32>
    %169 = math.exp %168 : vector<8x384xf32>
    %cst_40 = arith.constant 1.000000e+00 : f32
    %170 = vector.broadcast %cst_40 : f32 to vector<8x384xf32>
    %171 = arith.addf %170, %169 : vector<8x384xf32>
    %172 = arith.divf %170, %171 : vector<8x384xf32>
    %173 = vector.extract_strided_slice %172 {offsets = [0, 0], sizes = [8, 128], strides = [1, 1]} : vector<8x384xf32> to vector<8x128xf32>
    %174 = vector.extract_strided_slice %172 {offsets = [0, 128], sizes = [8, 128], strides = [1, 1]} : vector<8x384xf32> to vector<8x128xf32>
    %175 = vector.extract_strided_slice %172 {offsets = [0, 256], sizes = [8, 128], strides = [1, 1]} : vector<8x384xf32> to vector<8x128xf32>
    %176 = vector.extract_strided_slice %166 {offsets = [0, 384], sizes = [8, 128], strides = [1, 1]} : vector<8x512xf32> to vector<8x128xf32>
    %177 = math.tanh %176 : vector<8x128xf32>
    %178 = arith.mulf %174, %159 : vector<8x128xf32>
    %179 = arith.mulf %173, %177 : vector<8x128xf32>
    %180 = arith.addf %178, %179 : vector<8x128xf32>
    %181 = math.tanh %180 : vector<8x128xf32>
    %182 = arith.mulf %175, %181 : vector<8x128xf32>
    %183 = arith.truncf %182 : vector<8x128xf32> to vector<8x128xbf16>
    %c0_41 = arith.constant 0 : index
    %c0_42 = arith.constant 0 : index
    %184 = vector.load %arg4[%c0_41, %c0_42] : memref<128x128xbf16, #tpu.memory_space<vmem>>, vector<128x128xbf16>
    %cst_43 = arith.constant dense<0.000000e+00> : vector<8x128xf32>
    %185 = tpu.matmul %183, %184, %cst_43 {dimension_numbers = #tpu.dot_dimension_numbers<[1], [0], [0], [1], [0, 0, 1, 1], [], []>} : vector<8x128xbf16>, vector<128x128xbf16>, vector<8x128xf32> -> vector<8x128xf32>
    %c0_44 = arith.constant 0 : index
    %c0_45 = arith.constant 0 : index
    %186 = vector.load %arg5[%c0_44, %c0_45] : memref<1x128xf32, #tpu.memory_space<vmem>>, vector<1x128xf32>
    %187 = vector.broadcast %186 : vector<1x128xf32> to vector<8x128xf32>
    %188 = arith.addf %185, %187 : vector<8x128xf32>
    %c0_46 = arith.constant 0 : index
    %c0_47 = arith.constant 0 : index
    %189 = vector.load %arg6[%c0_46, %c0_47] : memref<8x128xf32, #tpu.memory_space<vmem>>, vector<8x128xf32>
    tpu.vector_store %arg6[%c0_46, %c0_47], %188 {strides = array<i32>} : memref<8x128xf32, #tpu.memory_space<vmem>>, vector<8x128xf32>,
    return
  }
}

</mosaic_0001>

<llo_original>
// kernel: forward.1
$region0: #{forward.1}
  #allocation0 [shape = 'u32[]', space=smem, size = 0x4, offset = 0x4, fixed_abs, tag = 'smem constant byte address 0x4 - core index']
  #allocation1 [shape = 'u32[144,128]{1,0:T(1,128)}', space=vmem, size = 0x12000, scoped, tag = 'internal scratch']
  %s0 = inlined_call_operand.vmem [shape: s32[64,1], index: 0, kind: input, shape index: {}]
  %s1 = inlined_call_operand.vmem [shape: bf16[128,512], index: 1, kind: input, shape index: {}]
  %s2 = inlined_call_operand.vmem [shape: bf16[128,512], index: 2, kind: input, shape index: {}]
  %s3 = inlined_call_operand.vmem [shape: f32[1,512], index: 3, kind: input, shape index: {}]
  %s4 = inlined_call_operand.vmem [shape: bf16[128,128], index: 4, kind: input, shape index: {}]
  %s5 = inlined_call_operand.vmem [shape: f32[1,128], index: 5, kind: input, shape index: {}]
  %s6 = inlined_call_operand.vmem [shape: f32[8,128], index: 6, kind: output, shape index: {}]
  %s7 = sld [smem:[#allocation0]]
  $region34: #{forward.1} parent=0
    _
  %s9 = ssub.s32 1, %s7
  %s10 = scalar_select 0, %s9, %s7
  // Predicated region
  $region2: #{forward.1} parent=0 // pred_check
    _
  $region3: #{forward.1} parent=0 // pred_check_branch
    %12 = sbr.rel (0) target = $region5
  $region4: #{forward.1} parent=0 // pred_region
    _
  $region5: #{forward.1} parent=0 // pred_fallthru
    _
  // Predicated region
  $region6: #{forward.1} parent=0 // pred_check
    _
  $region7: #{forward.1} parent=0 // pred_check_branch
    %14 = sbr.rel (0) target = $region9
  $region8: #{forward.1} parent=0 // pred_region
    _
  $region9: #{forward.1} parent=0 // pred_fallthru
    _
  // Predicated region
  $region10: #{forward.1} parent=0 // pred_check
    _
  $region11: #{forward.1} parent=0 // pred_check_branch
    %16 = sbr.rel (0) target = $region13
  $region12: #{forward.1} parent=0 // pred_region
    _
  $region13: #{forward.1} parent=0 // pred_fallthru
    _
  // Predicated region
  $region14: #{forward.1} parent=0 // pred_check
    _
  $region15: #{forward.1} parent=0 // pred_check_branch
    %18 = sbr.rel (0) target = $region17
  $region16: #{forward.1} parent=0 // pred_region
    _
  $region17: #{forward.1} parent=0 // pred_fallthru
    _
  // Predicated region
  $region18: #{forward.1} parent=0 // pred_check
    _
  $region19: #{forward.1} parent=0 // pred_check_branch
    %20 = sbr.rel (0) target = $region21
  $region20: #{forward.1} parent=0 // pred_region
    _
  $region21: #{forward.1} parent=0 // pred_fallthru
    _
  // Predicated region
  $region22: #{forward.1} parent=0 // pred_check
    _
  $region23: #{forward.1} parent=0 // pred_check_branch
    %22 = sbr.rel (0) target = $region25
  $region24: #{forward.1} parent=0 // pred_region
    _
  $region25: #{forward.1} parent=0 // pred_fallthru
    _
  %v24 = vld [vmem:[%s0] sm:$0xff]
  %v25 = vld [vmem:[%s0 + $0x8] sm:$0xff]
  %v26 = vld [vmem:[%s0 + $0x10] sm:$0xff]
  %v27 = vld [vmem:[%s0 + $0x18] sm:$0xff]
  %v28 = vld [vmem:[%s0 + $0x20] sm:$0xff]
  %v29 = vld [vmem:[%s0 + $0x28] sm:$0xff]
  %v30 = vld [vmem:[%s0 + $0x30] sm:$0xff]
  %v31 = vld [vmem:[%s0 + $0x38] sm:$0xff]
  %v32 = vlaneseq
  %v33 = vand.u32 %v32, 127
  %34 = vset.pattern.permute.xlu0 0
  %35 = vperm.xlu0 %34, %v24
  %v36 = vpop.permute.xlu0 %35
  %37 = vset.pattern.permute.xlu0 0
  %38 = vperm.xlu0 %37, %v25
  %v39 = vpop.permute.xlu0 %38
  %40 = vset.pattern.permute.xlu0 0
  %41 = vperm.xlu0 %40, %v26
  %v42 = vpop.permute.xlu0 %41
  %43 = vset.pattern.permute.xlu0 0
  %44 = vperm.xlu0 %43, %v27
  %v45 = vpop.permute.xlu0 %44
  %46 = vset.pattern.permute.xlu0 0
  %47 = vperm.xlu0 %46, %v28
  %v48 = vpop.permute.xlu0 %47
  %49 = vset.pattern.permute.xlu0 0
  %50 = vperm.xlu0 %49, %v29
  %v51 = vpop.permute.xlu0 %50
  %52 = vset.pattern.permute.xlu0 0
  %53 = vperm.xlu0 %52, %v30
  %v54 = vpop.permute.xlu0 %53
  %55 = vset.pattern.permute.xlu0 0
  %56 = vperm.xlu0 %55, %v31
  %v57 = vpop.permute.xlu0 %56
  %vm58 = vcmp.eq.s32.totalorder %v36, %v33
  %vm59 = vcmp.eq.s32.totalorder %v39, %v33
  %vm60 = vcmp.eq.s32.totalorder %v42, %v33
  %vm61 = vcmp.eq.s32.totalorder %v45, %v33
  %vm62 = vcmp.eq.s32.totalorder %v48, %v33
  %vm63 = vcmp.eq.s32.totalorder %v51, %v33
  %vm64 = vcmp.eq.s32.totalorder %v54, %v33
  %vm65 = vcmp.eq.s32.totalorder %v57, %v33
  %v66 = vsel %vm58, 1.0, 0.0
  %v67 = vsel %vm59, 1.0, 0.0
  %v68 = vsel %vm60, 1.0, 0.0
  %v69 = vsel %vm61, 1.0, 0.0
  %v70 = vsel %vm62, 1.0, 0.0
  %v71 = vsel %vm63, 1.0, 0.0
  %v72 = vsel %vm64, 1.0, 0.0
  %v73 = vsel %vm65, 1.0, 0.0
  %v74 = vpack.c.bf16 %v67, %v66
  %v75 = vpack.c.bf16 %v69, %v68
  %v76 = vpack.c.bf16 %v71, %v70
  %v77 = vpack.c.bf16 %v73, %v72
  %v78 = vld [vmem:[%s1] sm:$0xff]
  %v79 = vld [vmem:[%s1 + $0x8] sm:$0xff]
  %v80 = vld [vmem:[%s1 + $0x10] sm:$0xff]
  %v81 = vld [vmem:[%s1 + $0x18] sm:$0xff]
  %v82 = vld [vmem:[%s1 + $0x20] sm:$0xff]
  %v83 = vld [vmem:[%s1 + $0x28] sm:$0xff]
  %v84 = vld [vmem:[%s1 + $0x30] sm:$0xff]
  %v85 = vld [vmem:[%s1 + $0x38] sm:$0xff]
  %v86 = vld [vmem:[%s1 + $0x40] sm:$0xff]
  %v87 = vld [vmem:[%s1 + $0x48] sm:$0xff]
  %v88 = vld [vmem:[%s1 + $0x50] sm:$0xff]
  %v89 = vld [vmem:[%s1 + $0x58] sm:$0xff]
  %v90 = vld [vmem:[%s1 + $0x60] sm:$0xff]
  %v91 = vld [vmem:[%s1 + $0x68] sm:$0xff]
  %v92 = vld [vmem:[%s1 + $0x70] sm:$0xff]
  %v93 = vld [vmem:[%s1 + $0x78] sm:$0xff]
  %v94 = vld [vmem:[%s1 + $0x80] sm:$0xff]
  %v95 = vld [vmem:[%s1 + $0x88] sm:$0xff]
  %v96 = vld [vmem:[%s1 + $0x90] sm:$0xff]
  %v97 = vld [vmem:[%s1 + $0x98] sm:$0xff]
  %v98 = vld [vmem:[%s1 + $0xa0] sm:$0xff]
  %v99 = vld [vmem:[%s1 + $0xa8] sm:$0xff]
  %v100 = vld [vmem:[%s1 + $0xb0] sm:$0xff]
  %v101 = vld [vmem:[%s1 + $0xb8] sm:$0xff]
  %v102 = vld [vmem:[%s1 + $0xc0] sm:$0xff]
  %v103 = vld [vmem:[%s1 + $0xc8] sm:$0xff]
  %v104 = vld [vmem:[%s1 + $0xd0] sm:$0xff]
  %v105 = vld [vmem:[%s1 + $0xd8] sm:$0xff]
  %v106 = vld [vmem:[%s1 + $0xe0] sm:$0xff]
  %v107 = vld [vmem:[%s1 + $0xe8] sm:$0xff]
  %v108 = vld [vmem:[%s1 + $0xf0] sm:$0xff]
  %v109 = vld [vmem:[%s1 + $0xf8] sm:$0xff]
  %v110 = vld [vmem:[%s3] sm:$0xf]
  %v112 = vlaneseq
  %v113 = vshrl.u32 %v112, 7
  %v114 = vsub.s32 0, %v113
  %v115 = vrot.slane %v110, %v114
  %v116 = vlaneseq
  %v117 = vshrl.u32 %v116, 7
  %v118 = vsub.s32 1, %v117
  %v119 = vrot.slane %v110, %v118
  %v120 = vlaneseq
  %v121 = vshrl.u32 %v120, 7
  %v122 = vsub.s32 2, %v121
  %v123 = vrot.slane %v110, %v122
  %v124 = vlaneseq
  %v125 = vshrl.u32 %v124, 7
  %v126 = vsub.s32 3, %v125
  %v127 = vrot.slane %v110, %v126
  %v164 = vunpack.c.l.b16 %v78
  %v165 = vunpack.c.h.b16 %v78
  %v166 = vunpack.c.l.b16 %v79
  %v167 = vunpack.c.h.b16 %v79
  %v168 = vunpack.c.l.b16 %v80
  %v169 = vunpack.c.h.b16 %v80
  %v170 = vunpack.c.l.b16 %v81
  %v171 = vunpack.c.h.b16 %v81
  %v172 = vunpack.c.l.b16 %v82
  %v173 = vunpack.c.h.b16 %v82
  %v174 = vunpack.c.l.b16 %v83
  %v175 = vunpack.c.h.b16 %v83
  %v176 = vunpack.c.l.b16 %v84
  %v177 = vunpack.c.h.b16 %v84
  %v178 = vunpack.c.l.b16 %v85
  %v179 = vunpack.c.h.b16 %v85
  %v180 = vunpack.c.l.b16 %v86
  %v181 = vunpack.c.h.b16 %v86
  %v182 = vunpack.c.l.b16 %v87
  %v183 = vunpack.c.h.b16 %v87
  %v184 = vunpack.c.l.b16 %v88
  %v185 = vunpack.c.h.b16 %v88
  %v186 = vunpack.c.l.b16 %v89
  %v187 = vunpack.c.h.b16 %v89
  %v188 = vunpack.c.l.b16 %v90
  %v189 = vunpack.c.h.b16 %v90
  %v190 = vunpack.c.l.b16 %v91
  %v191 = vunpack.c.h.b16 %v91
  %v192 = vunpack.c.l.b16 %v92
  %v193 = vunpack.c.h.b16 %v92
  %v194 = vunpack.c.l.b16 %v93
  %v195 = vunpack.c.h.b16 %v93
  %v196 = vunpack.c.l.b16 %v94
  %v197 = vunpack.c.h.b16 %v94
  %v198 = vunpack.c.l.b16 %v95
  %v199 = vunpack.c.h.b16 %v95
  %v200 = vunpack.c.l.b16 %v96
  %v201 = vunpack.c.h.b16 %v96
  %v202 = vunpack.c.l.b16 %v97
  %v203 = vunpack.c.h.b16 %v97
  %v204 = vunpack.c.l.b16 %v98
  %v205 = vunpack.c.h.b16 %v98
  %v206 = vunpack.c.l.b16 %v99
  %v207 = vunpack.c.h.b16 %v99
  %v208 = vunpack.c.l.b16 %v100
  %v209 = vunpack.c.h.b16 %v100
  %v210 = vunpack.c.l.b16 %v101
  %v211 = vunpack.c.h.b16 %v101
  %v212 = vunpack.c.l.b16 %v102
  %v213 = vunpack.c.h.b16 %v102
  %v214 = vunpack.c.l.b16 %v103
  %v215 = vunpack.c.h.b16 %v103
  %v216 = vunpack.c.l.b16 %v104
  %v217 = vunpack.c.h.b16 %v104
  %v218 = vunpack.c.l.b16 %v105
  %v219 = vunpack.c.h.b16 %v105
  %v220 = vunpack.c.l.b16 %v106
  %v221 = vunpack.c.h.b16 %v106
  %v222 = vunpack.c.l.b16 %v107
  %v223 = vunpack.c.h.b16 %v107
  %v224 = vunpack.c.l.b16 %v108
  %v225 = vunpack.c.h.b16 %v108
  %v226 = vunpack.c.l.b16 %v109
  %v227 = vunpack.c.h.b16 %v109
  %v228 = vpack.c.b16 %v168, %v164
  %v229 = vpack.c.b16 %v169, %v165
  %v230 = vpack.c.b16 %v170, %v166
  %v231 = vpack.c.b16 %v171, %v167
  %v232 = vpack.c.b16 %v176, %v172
  %v233 = vpack.c.b16 %v177, %v173
  %v234 = vpack.c.b16 %v178, %v174
  %v235 = vpack.c.b16 %v179, %v175
  %v236 = vpack.c.b16 %v184, %v180
  %v237 = vpack.c.b16 %v185, %v181
  %v238 = vpack.c.b16 %v186, %v182
  %v239 = vpack.c.b16 %v187, %v183
  %v240 = vpack.c.b16 %v192, %v188
  %v241 = vpack.c.b16 %v193, %v189
  %v242 = vpack.c.b16 %v194, %v190
  %v243 = vpack.c.b16 %v195, %v191
  %v244 = vpack.c.b16 %v200, %v196
  %v245 = vpack.c.b16 %v201, %v197
  %v246 = vpack.c.b16 %v202, %v198
  %v247 = vpack.c.b16 %v203, %v199
  %v248 = vpack.c.b16 %v208, %v204
  %v249 = vpack.c.b16 %v209, %v205
  %v250 = vpack.c.b16 %v210, %v206
  %v251 = vpack.c.b16 %v211, %v207
  %v252 = vpack.c.b16 %v216, %v212
  %v253 = vpack.c.b16 %v217, %v213
  %v254 = vpack.c.b16 %v218, %v214
  %v255 = vpack.c.b16 %v219, %v215
  %v256 = vpack.c.b16 %v224, %v220
  %v257 = vpack.c.b16 %v225, %v221
  %v258 = vpack.c.b16 %v226, %v222
  %v259 = vpack.c.b16 %v227, %v223
  %292 = vmatprep.subr.bf16.mxu0 %v229
  %293 = vmatpush1.bf16.msra.mxu0 %v228
  %294 = vmatprep.subr.bf16.mxu0 %v233
  %295 = vmatpush1.bf16.msra.mxu0 %v232
  %296 = vmatprep.subr.bf16.mxu0 %v237
  %297 = vmatpush1.bf16.msra.mxu0 %v236
  %298 = vmatprep.subr.bf16.mxu0 %v241
  %299 = vmatpush1.bf16.msra.mxu0 %v240
  %300 = vmatprep.subr.bf16.mxu0 %v245
  %301 = vmatpush1.bf16.msra.mxu0 %v244
  %302 = vmatprep.subr.bf16.mxu0 %v249
  %303 = vmatpush1.bf16.msra.mxu0 %v248
  %304 = vmatprep.subr.bf16.mxu0 %v253
  %305 = vmatpush1.bf16.msra.mxu0 %v252
  %306 = vmatprep.subr.bf16.mxu0 %v257
  %307 = vmatpush1.bf16.msra.mxu0 %v256
  %308 = vmatprep.subr.bf16.mxu0 0
  %309 = vmatpush1.bf16.msra.mxu0 0
  %310 = vmatprep.subr.bf16.mxu0 0
  %311 = vmatpush1.bf16.msra.mxu0 0
  %312 = vmatprep.subr.bf16.mxu0 0
  %313 = vmatpush1.bf16.msra.mxu0 0
  %314 = vmatprep.subr.bf16.mxu0 0
  %315 = vmatpush1.bf16.msra.mxu0 0
  %316 = vmatprep.subr.bf16.mxu0 0
  %317 = vmatpush1.bf16.msra.mxu0 0
  %318 = vmatprep.subr.bf16.mxu0 0
  %319 = vmatpush1.bf16.msra.mxu0 0
  %320 = vmatprep.subr.bf16.mxu0 0
  %321 = vmatpush1.bf16.msra.mxu0 0
  %322 = vmatprep.subr.bf16.mxu0 0
  %323 = vmatpush1.bf16.msra.mxu0 0
  %324 = vmatprep.mubr.bf16.mxu0 0
  %325 = vmatmul.mubr.bf16.gmra.mrb[0].mxu0 %v74
  %v326 = vpop.f32.mrb[0].mxu0
  %v327 = vadd.f32 %v115, %v326
  %v328 = vpop.f32.mrb[0].mxu0
  %v329 = vadd.f32 %v119, %v328
  %v330 = vpop.f32.mrb[0].mxu0
  %v331 = vadd.f32 %v115, %v330
  %v332 = vpop.f32.mrb[0].mxu0
  %v333 = vadd.f32 %v119, %v332
  %334 = vmatprep.mubr.bf16.mxu0 0
  %335 = vmatmul.mubr.bf16.gmra.mrb[0].mxu0 %v75
  %v336 = vpop.f32.mrb[0].mxu0
  %v337 = vadd.f32 %v115, %v336
  %v338 = vpop.f32.mrb[0].mxu0
  %v339 = vadd.f32 %v119, %v338
  %v340 = vpop.f32.mrb[0].mxu0
  %v341 = vadd.f32 %v115, %v340
  %v342 = vpop.f32.mrb[0].mxu0
  %v343 = vadd.f32 %v119, %v342
  %344 = vmatprep.mubr.bf16.mxu0 0
  %345 = vmatmul.mubr.bf16.gmra.mrb[0].mxu0 %v76
  %v346 = vpop.f32.mrb[0].mxu0
  %v347 = vadd.f32 %v115, %v346
  %v348 = vpop.f32.mrb[0].mxu0
  %v349 = vadd.f32 %v119, %v348
  %v350 = vpop.f32.mrb[0].mxu0
  %v351 = vadd.f32 %v115, %v350
  %v352 = vpop.f32.mrb[0].mxu0
  %v353 = vadd.f32 %v119, %v352
  %354 = vmatprep.mubr.bf16.mxu0 0
  %355 = vmatmul.mubr.bf16.gmra.mrb[0].mxu0 %v77
  %v356 = vpop.f32.mrb[0].mxu0
  %v357 = vadd.f32 %v115, %v356
  %v358 = vpop.f32.mrb[0].mxu0
  %v359 = vadd.f32 %v119, %v358
  %v360 = vpop.f32.mrb[0].mxu0
  %v361 = vadd.f32 %v115, %v360
  %v362 = vpop.f32.mrb[0].mxu0
  %v363 = vadd.f32 %v119, %v362
  %364 = vdwg.mxu0
  %365 = vmatprep.subr.bf16.mxu0 %v231
  %366 = vmatpush1.bf16.msra.mxu0 %v230
  %367 = vmatprep.subr.bf16.mxu0 %v235
  %368 = vmatpush1.bf16.msra.mxu0 %v234
  %369 = vmatprep.subr.bf16.mxu0 %v239
  %370 = vmatpush1.bf16.msra.mxu0 %v238
  %371 = vmatprep.subr.bf16.mxu0 %v243
  %372 = vmatpush1.bf16.msra.mxu0 %v242
  %373 = vmatprep.subr.bf16.mxu0 %v247
  %374 = vmatpush1.bf16.msra.mxu0 %v246
  %375 = vmatprep.subr.bf16.mxu0 %v251
  %376 = vmatpush1.bf16.msra.mxu0 %v250
  %377 = vmatprep.subr.bf16.mxu0 %v255
  %378 = vmatpush1.bf16.msra.mxu0 %v254
  %379 = vmatprep.subr.bf16.mxu0 %v259
  %380 = vmatpush1.bf16.msra.mxu0 %v258
  %381 = vmatprep.subr.bf16.mxu0 0
  %382 = vmatpush1.bf16.msra.mxu0 0
  %383 = vmatprep.subr.bf16.mxu0 0
  %384 = vmatpush1.bf16.msra.mxu0 0
  %385 = vmatprep.subr.bf16.mxu0 0
  %386 = vmatpush1.bf16.msra.mxu0 0
  %387 = vmatprep.subr.bf16.mxu0 0
  %388 = vmatpush1.bf16.msra.mxu0 0
  %389 = vmatprep.subr.bf16.mxu0 0
  %390 = vmatpush1.bf16.msra.mxu0 0
  %391 = vmatprep.subr.bf16.mxu0 0
  %392 = vmatpush1.bf16.msra.mxu0 0
  %393 = vmatprep.subr.bf16.mxu0 0
  %394 = vmatpush1.bf16.msra.mxu0 0
  %395 = vmatprep.subr.bf16.mxu0 0
  %396 = vmatpush1.bf16.msra.mxu0 0
  %397 = vmatprep.mubr.bf16.mxu0 0
  %398 = vmatmul.mubr.bf16.gmra.mrb[0].mxu0 %v74
  %v399 = vpop.f32.mrb[0].mxu0
  %v400 = vadd.f32 %v123, %v399
  %v401 = vpop.f32.mrb[0].mxu0
  %v402 = vadd.f32 %v127, %v401
  %v403 = vpop.f32.mrb[0].mxu0
  %v404 = vadd.f32 %v123, %v403
  %v405 = vpop.f32.mrb[0].mxu0
  %v406 = vadd.f32 %v127, %v405
  %407 = vmatprep.mubr.bf16.mxu0 0
  %408 = vmatmul.mubr.bf16.gmra.mrb[0].mxu0 %v75
  %v409 = vpop.f32.mrb[0].mxu0
  %v410 = vadd.f32 %v123, %v409
  %v411 = vpop.f32.mrb[0].mxu0
  %v412 = vadd.f32 %v127, %v411
  %v413 = vpop.f32.mrb[0].mxu0
  %v414 = vadd.f32 %v123, %v413
  %v415 = vpop.f32.mrb[0].mxu0
  %v416 = vadd.f32 %v127, %v415
  %417 = vmatprep.mubr.bf16.mxu0 0
  %418 = vmatmul.mubr.bf16.gmra.mrb[0].mxu0 %v76
  %v419 = vpop.f32.mrb[0].mxu0
  %v420 = vadd.f32 %v123, %v419
  %v421 = vpop.f32.mrb[0].mxu0
  %v422 = vadd.f32 %v127, %v421
  %v423 = vpop.f32.mrb[0].mxu0
  %v424 = vadd.f32 %v123, %v423
  %v425 = vpop.f32.mrb[0].mxu0
  %v426 = vadd.f32 %v127, %v425
  %427 = vmatprep.mubr.bf16.mxu0 0
  %428 = vmatmul.mubr.bf16.gmra.mrb[0].mxu0 %v77
  %v429 = vpop.f32.mrb[0].mxu0
  %v430 = vadd.f32 %v123, %v429
  %v431 = vpop.f32.mrb[0].mxu0
  %v432 = vadd.f32 %v127, %v431
  %v433 = vpop.f32.mrb[0].mxu0
  %v434 = vadd.f32 %v123, %v433
  %v435 = vpop.f32.mrb[0].mxu0
  %v436 = vadd.f32 %v127, %v435
  %437 = vdwg.mxu0
  %v438 = vld [vmem:[%s2] sm:$0xff]
  %v439 = vld [vmem:[%s2 + $0x8] sm:$0xff]
  %v440 = vld [vmem:[%s2 + $0x10] sm:$0xff]
  %v441 = vld [vmem:[%s2 + $0x18] sm:$0xff]
  %v442 = vld [vmem:[%s2 + $0x20] sm:$0xff]
  %v443 = vld [vmem:[%s2 + $0x28] sm:$0xff]
  %v444 = vld [vmem:[%s2 + $0x30] sm:$0xff]
  %v445 = vld [vmem:[%s2 + $0x38] sm:$0xff]
  %v446 = vld [vmem:[%s2 + $0x40] sm:$0xff]
  %v447 = vld [vmem:[%s2 + $0x48] sm:$0xff]
  %v448 = vld [vmem:[%s2 + $0x50] sm:$0xff]
  %v449 = vld [vmem:[%s2 + $0x58] sm:$0xff]
  %v450 = vld [vmem:[%s2 + $0x60] sm:$0xff]
  %v451 = vld [vmem:[%s2 + $0x68] sm:$0xff]
  %v452 = vld [vmem:[%s2 + $0x70] sm:$0xff]
  %v453 = vld [vmem:[%s2 + $0x78] sm:$0xff]
  %v454 = vld [vmem:[%s2 + $0x80] sm:$0xff]
  %v455 = vld [vmem:[%s2 + $0x88] sm:$0xff]
  %v456 = vld [vmem:[%s2 + $0x90] sm:$0xff]
  %v457 = vld [vmem:[%s2 + $0x98] sm:$0xff]
  %v458 = vld [vmem:[%s2 + $0xa0] sm:$0xff]
  %v459 = vld [vmem:[%s2 + $0xa8] sm:$0xff]
  %v460 = vld [vmem:[%s2 + $0xb0] sm:$0xff]
  %v461 = vld [vmem:[%s2 + $0xb8] sm:$0xff]
  %v462 = vld [vmem:[%s2 + $0xc0] sm:$0xff]
  %v463 = vld [vmem:[%s2 + $0xc8] sm:$0xff]
  %v464 = vld [vmem:[%s2 + $0xd0] sm:$0xff]
  %v465 = vld [vmem:[%s2 + $0xd8] sm:$0xff]
  %v466 = vld [vmem:[%s2 + $0xe0] sm:$0xff]
  %v467 = vld [vmem:[%s2 + $0xe8] sm:$0xff]
  %v468 = vld [vmem:[%s2 + $0xf0] sm:$0xff]
  %v469 = vld [vmem:[%s2 + $0xf8] sm:$0xff]
  %v502 = vunpack.c.l.b16 %v438
  %v503 = vunpack.c.h.b16 %v438
  %v504 = vunpack.c.l.b16 %v439
  %v505 = vunpack.c.h.b16 %v439
  %v506 = vunpack.c.l.b16 %v440
  %v507 = vunpack.c.h.b16 %v440
  %v508 = vunpack.c.l.b16 %v441
  %v509 = vunpack.c.h.b16 %v441
  %v510 = vunpack.c.l.b16 %v442
  %v511 = vunpack.c.h.b16 %v442
  %v512 = vunpack.c.l.b16 %v443
  %v513 = vunpack.c.h.b16 %v443
  %v514 = vunpack.c.l.b16 %v444
  %v515 = vunpack.c.h.b16 %v444
  %v516 = vunpack.c.l.b16 %v445
  %v517 = vunpack.c.h.b16 %v445
  %v518 = vunpack.c.l.b16 %v446
  %v519 = vunpack.c.h.b16 %v446
  %v520 = vunpack.c.l.b16 %v447
  %v521 = vunpack.c.h.b16 %v447
  %v522 = vunpack.c.l.b16 %v448
  %v523 = vunpack.c.h.b16 %v448
  %v524 = vunpack.c.l.b16 %v449
  %v525 = vunpack.c.h.b16 %v449
  %v526 = vunpack.c.l.b16 %v450
  %v527 = vunpack.c.h.b16 %v450
  %v528 = vunpack.c.l.b16 %v451
  %v529 = vunpack.c.h.b16 %v451
  %v530 = vunpack.c.l.b16 %v452
  %v531 = vunpack.c.h.b16 %v452
  %v532 = vunpack.c.l.b16 %v453
  %v533 = vunpack.c.h.b16 %v453
  %v534 = vunpack.c.l.b16 %v454
  %v535 = vunpack.c.h.b16 %v454
  %v536 = vunpack.c.l.b16 %v455
  %v537 = vunpack.c.h.b16 %v455
  %v538 = vunpack.c.l.b16 %v456
  %v539 = vunpack.c.h.b16 %v456
  %v540 = vunpack.c.l.b16 %v457
  %v541 = vunpack.c.h.b16 %v457
  %v542 = vunpack.c.l.b16 %v458
  %v543 = vunpack.c.h.b16 %v458
  %v544 = vunpack.c.l.b16 %v459
  %v545 = vunpack.c.h.b16 %v459
  %v546 = vunpack.c.l.b16 %v460
  %v547 = vunpack.c.h.b16 %v460
  %v548 = vunpack.c.l.b16 %v461
  %v549 = vunpack.c.h.b16 %v461
  %v550 = vunpack.c.l.b16 %v462
  %v551 = vunpack.c.h.b16 %v462
  %v552 = vunpack.c.l.b16 %v463
  %v553 = vunpack.c.h.b16 %v463
  %v554 = vunpack.c.l.b16 %v464
  %v555 = vunpack.c.h.b16 %v464
  %v556 = vunpack.c.l.b16 %v465
  %v557 = vunpack.c.h.b16 %v465
  %v558 = vunpack.c.l.b16 %v466
  %v559 = vunpack.c.h.b16 %v466
  %v560 = vunpack.c.l.b16 %v467
  %v561 = vunpack.c.h.b16 %v467
  %v562 = vunpack.c.l.b16 %v468
  %v563 = vunpack.c.h.b16 %v468
  %v564 = vunpack.c.l.b16 %v469
  %v565 = vunpack.c.h.b16 %v469
  %v566 = vpack.c.b16 %v506, %v502
  %v567 = vpack.c.b16 %v507, %v503
  %v568 = vpack.c.b16 %v508, %v504
  %v569 = vpack.c.b16 %v509, %v505
  %v570 = vpack.c.b16 %v514, %v510
  %v571 = vpack.c.b16 %v515, %v511
  %v572 = vpack.c.b16 %v516, %v512
  %v573 = vpack.c.b16 %v517, %v513
  %v574 = vpack.c.b16 %v522, %v518
  %v575 = vpack.c.b16 %v523, %v519
  %v576 = vpack.c.b16 %v524, %v520
  %v577 = vpack.c.b16 %v525, %v521
  %v578 = vpack.c.b16 %v530, %v526
  %v579 = vpack.c.b16 %v531, %v527
  %v580 = vpack.c.b16 %v532, %v528
  %v581 = vpack.c.b16 %v533, %v529
  %v582 = vpack.c.b16 %v538, %v534
  %v583 = vpack.c.b16 %v539, %v535
  %v584 = vpack.c.b16 %v540, %v536
  %v585 = vpack.c.b16 %v541, %v537
  %v586 = vpack.c.b16 %v546, %v542
  %v587 = vpack.c.b16 %v547, %v543
  %v588 = vpack.c.b16 %v548, %v544
  %v589 = vpack.c.b16 %v549, %v545
  %v590 = vpack.c.b16 %v554, %v550
  %v591 = vpack.c.b16 %v555, %v551
  %v592 = vpack.c.b16 %v556, %v552
  %v593 = vpack.c.b16 %v557, %v553
  %v594 = vpack.c.b16 %v562, %v558
  %v595 = vpack.c.b16 %v563, %v559
  %v596 = vpack.c.b16 %v564, %v560
  %v597 = vpack.c.b16 %v565, %v561
  %630 = vmatprep.subr.bf16.mxu0 %v567
  %631 = vmatpush1.bf16.msra.mxu0 %v566
  %632 = vmatprep.subr.bf16.mxu0 %v571
  %633 = vmatpush1.bf16.msra.mxu0 %v570
  %634 = vmatprep.subr.bf16.mxu0 %v575
  %635 = vmatpush1.bf16.msra.mxu0 %v574
  %636 = vmatprep.subr.bf16.mxu0 %v579
  %637 = vmatpush1.bf16.msra.mxu0 %v578
  %638 = vmatprep.subr.bf16.mxu0 %v583
  %639 = vmatpush1.bf16.msra.mxu0 %v582
  %640 = vmatprep.subr.bf16.mxu0 %v587
  %641 = vmatpush1.bf16.msra.mxu0 %v586
  %642 = vmatprep.subr.bf16.mxu0 %v591
  %643 = vmatpush1.bf16.msra.mxu0 %v590
  %644 = vmatprep.subr.bf16.mxu0 %v595
  %645 = vmatpush1.bf16.msra.mxu0 %v594
  %646 = vmatprep.subr.bf16.mxu0 0
  %647 = vmatpush1.bf16.msra.mxu0 0
  %648 = vmatprep.subr.bf16.mxu0 0
  %649 = vmatpush1.bf16.msra.mxu0 0
  %650 = vmatprep.subr.bf16.mxu0 0
  %651 = vmatpush1.bf16.msra.mxu0 0
  %652 = vmatprep.subr.bf16.mxu0 0
  %653 = vmatpush1.bf16.msra.mxu0 0
  %654 = vmatprep.subr.bf16.mxu0 0
  %655 = vmatpush1.bf16.msra.mxu0 0
  %656 = vmatprep.subr.bf16.mxu0 0
  %657 = vmatpush1.bf16.msra.mxu0 0
  %658 = vmatprep.subr.bf16.mxu0 0
  %659 = vmatpush1.bf16.msra.mxu0 0
  %660 = vmatprep.subr.bf16.mxu0 0
  %661 = vmatpush1.bf16.msra.mxu0 0
  %662 = vmatprep.mubr.bf16.mxu0 0
  %663 = vmatmul.mubr.bf16.gmra.mrb[0].mxu0 0
  %v664 = vpop.f32.mrb[0].mxu0
  %v665 = vadd.f32 0.0, %v664
  %v666 = vpop.f32.mrb[0].mxu0
  %v667 = vadd.f32 0.0, %v666
  %v668 = vpop.f32.mrb[0].mxu0
  %v669 = vpop.f32.mrb[0].mxu0
  %670 = vdwg.mxu0
  %671 = vmatprep.subr.bf16.mxu0 %v569
  %672 = vmatpush1.bf16.msra.mxu0 %v568
  %673 = vmatprep.subr.bf16.mxu0 %v573
  %674 = vmatpush1.bf16.msra.mxu0 %v572
  %675 = vmatprep.subr.bf16.mxu0 %v577
  %676 = vmatpush1.bf16.msra.mxu0 %v576
  %677 = vmatprep.subr.bf16.mxu0 %v581
  %678 = vmatpush1.bf16.msra.mxu0 %v580
  %679 = vmatprep.subr.bf16.mxu0 %v585
  %680 = vmatpush1.bf16.msra.mxu0 %v584
  %681 = vmatprep.subr.bf16.mxu0 %v589
  %682 = vmatpush1.bf16.msra.mxu0 %v588
  %683 = vmatprep.subr.bf16.mxu0 %v593
  %684 = vmatpush1.bf16.msra.mxu0 %v592
  %685 = vmatprep.subr.bf16.mxu0 %v597
  %686 = vmatpush1.bf16.msra.mxu0 %v596
  %687 = vmatprep.subr.bf16.mxu0 0
  %688 = vmatpush1.bf16.msra.mxu0 0
  %689 = vmatprep.subr.bf16.mxu0 0
  %690 = vmatpush1.bf16.msra.mxu0 0
  %691 = vmatprep.subr.bf16.mxu0 0
  %692 = vmatpush1.bf16.msra.mxu0 0
  %693 = vmatprep.subr.bf16.mxu0 0
  %694 = vmatpush1.bf16.msra.mxu0 0
  %695 = vmatprep.subr.bf16.mxu0 0
  %696 = vmatpush1.bf16.msra.mxu0 0
  %697 = vmatprep.subr.bf16.mxu0 0
  %698 = vmatpush1.bf16.msra.mxu0 0
  %699 = vmatprep.subr.bf16.mxu0 0
  %700 = vmatpush1.bf16.msra.mxu0 0
  %701 = vmatprep.subr.bf16.mxu0 0
  %702 = vmatpush1.bf16.msra.mxu0 0
  %703 = vmatprep.mubr.bf16.mxu0 0
  %704 = vmatmul.mubr.bf16.gmra.mrb[0].mxu0 0
  %v705 = vpop.f32.mrb[0].mxu0
  %v706 = vadd.f32 0.0, %v705
  %v707 = vpop.f32.mrb[0].mxu0
  %v708 = vadd.f32 0.0, %v707
  %v709 = vpop.f32.mrb[0].mxu0
  %v710 = vpop.f32.mrb[0].mxu0
  %711 = vdwg.mxu0
  %v712 = vadd.f32 %v327, %v665
  %v713 = vadd.f32 %v329, %v667
  %v714 = vadd.f32 %v400, %v706
  %v715 = vadd.f32 %v402, %v708
  %v716 = vxor.u32 %v712, 2147483648
  %v717 = vxor.u32 %v713, 2147483648
  %v718 = vxor.u32 %v714, 2147483648
  %v719 = vmul.f32 %v716, 1.442695
  %v720 = vpow.pop %v719
  %v721 = vmul.f32 %v717, 1.442695
  %v722 = vpow.pop %v721
  %v723 = vmul.f32 %v718, 1.442695
  %v724 = vpow.pop %v723
  %v725 = vadd.f32 %v720, 1.0
  %v726 = vadd.f32 %v722, 1.0
  %v727 = vadd.f32 %v724, 1.0
  %v728 = vrcp.pop %v725
  %v729 = vmul.f32 1.0, %v728
  %v730 = vrcp.pop %v726
  %v731 = vmul.f32 1.0, %v730
  %v732 = vrcp.pop %v727
  %v733 = vmul.f32 1.0, %v732
  %v734 = vtanh.pop %v715
  %v735 = vmul.f32 %v731, 0.0
  %v736 = vmul.f32 %v729, %v734
  %v737 = vadd.f32 %v735, %v736
  %v738 = vtanh.pop %v737
  %v739 = vmul.f32 %v733, %v738
  %v740 = vpack.c.bf16 %v739, %v739
  %741 = vmatprep.subr.bf16.mxu0 %v567
  %742 = vmatpush1.bf16.msra.mxu0 %v566
  %743 = vmatprep.subr.bf16.mxu0 %v571
  %744 = vmatpush1.bf16.msra.mxu0 %v570
  %745 = vmatprep.subr.bf16.mxu0 %v575
  %746 = vmatpush1.bf16.msra.mxu0 %v574
  %747 = vmatprep.subr.bf16.mxu0 %v579
  %748 = vmatpush1.bf16.msra.mxu0 %v578
  %749 = vmatprep.subr.bf16.mxu0 %v583
  %750 = vmatpush1.bf16.msra.mxu0 %v582
  %751 = vmatprep.subr.bf16.mxu0 %v587
  %752 = vmatpush1.bf16.msra.mxu0 %v586
  %753 = vmatprep.subr.bf16.mxu0 %v591
  %754 = vmatpush1.bf16.msra.mxu0 %v590
  %755 = vmatprep.subr.bf16.mxu0 %v595
  %756 = vmatpush1.bf16.msra.mxu0 %v594
  %757 = vmatprep.subr.bf16.mxu0 0
  %758 = vmatpush1.bf16.msra.mxu0 0
  %759 = vmatprep.subr.bf16.mxu0 0
  %760 = vmatpush1.bf16.msra.mxu0 0
  %761 = vmatprep.subr.bf16.mxu0 0
  %762 = vmatpush1.bf16.msra.mxu0 0
  %763 = vmatprep.subr.bf16.mxu0 0
  %764 = vmatpush1.bf16.msra.mxu0 0
  %765 = vmatprep.subr.bf16.mxu0 0
  %766 = vmatpush1.bf16.msra.mxu0 0
  %767 = vmatprep.subr.bf16.mxu0 0
  %768 = vmatpush1.bf16.msra.mxu0 0
  %769 = vmatprep.subr.bf16.mxu0 0
  %770 = vmatpush1.bf16.msra.mxu0 0
  %771 = vmatprep.subr.bf16.mxu0 0
  %772 = vmatpush1.bf16.msra.mxu0 0
  %773 = vmatprep.mubr.bf16.mxu0 0
  %774 = vmatmul.mubr.bf16.gmra.mrb[0].mxu0 %v740
  %v775 = vpop.f32.mrb[0].mxu0
  %v776 = vadd.f32 0.0, %v775
  %v777 = vpop.f32.mrb[0].mxu0
  %v778 = vadd.f32 0.0, %v777
  %v779 = vpop.f32.mrb[0].mxu0
  %v780 = vpop.f32.mrb[0].mxu0
  %781 = vdwg.mxu0
  %782 = vmatprep.subr.bf16.mxu0 %v569
  %783 = vmatpush1.bf16.msra.mxu0 %v568
  %784 = vmatprep.subr.bf16.mxu0 %v573
  %785 = vmatpush1.bf16.msra.mxu0 %v572
  %786 = vmatprep.subr.bf16.mxu0 %v577
  %787 = vmatpush1.bf16.msra.mxu0 %v576
  %788 = vmatprep.subr.bf16.mxu0 %v581
  %789 = vmatpush1.bf16.msra.mxu0 %v580
  %790 = vmatprep.subr.bf16.mxu0 %v585
  %791 = vmatpush1.bf16.msra.mxu0 %v584
  %792 = vmatprep.subr.bf16.mxu0 %v589
  %793 = vmatpush1.bf16.msra.mxu0 %v588
  %794 = vmatprep.subr.bf16.mxu0 %v593
  %795 = vmatpush1.bf16.msra.mxu0 %v592
  %796 = vmatprep.subr.bf16.mxu0 %v597
  %797 = vmatpush1.bf16.msra.mxu0 %v596
  %798 = vmatprep.subr.bf16.mxu0 0
  %799 = vmatpush1.bf16.msra.mxu0 0
  %800 = vmatprep.subr.bf16.mxu0 0
  %801 = vmatpush1.bf16.msra.mxu0 0
  %802 = vmatprep.subr.bf16.mxu0 0
  %803 = vmatpush1.bf16.msra.mxu0 0
  %804 = vmatprep.subr.bf16.mxu0 0
  %805 = vmatpush1.bf16.msra.mxu0 0
  %806 = vmatprep.subr.bf16.mxu0 0
  %807 = vmatpush1.bf16.msra.mxu0 0
  %808 = vmatprep.subr.bf16.mxu0 0
  %809 = vmatpush1.bf16.msra.mxu0 0
  %810 = vmatprep.subr.bf16.mxu0 0
  %811 = vmatpush1.bf16.msra.mxu0 0
  %812 = vmatprep.subr.bf16.mxu0 0
  %813 = vmatpush1.bf16.msra.mxu0 0
  %814 = vmatprep.mubr.bf16.mxu0 0
  %815 = vmatmul.mubr.bf16.gmra.mrb[0].mxu0 %v740
  %v816 = vpop.f32.mrb[0].mxu0
  %v817 = vadd.f32 0.0, %v816
  %v818 = vpop.f32.mrb[0].mxu0
  %v819 = vadd.f32 0.0, %v818
  %v820 = vpop.f32.mrb[0].mxu0
  %v821 = vpop.f32.mrb[0].mxu0
  %822 = vdwg.mxu0
  %v823 = vadd.f32 %v331, %v776
  %v824 = vadd.f32 %v333, %v778
  %v825 = vadd.f32 %v404, %v817
  %v826 = vadd.f32 %v406, %v819
  %v827 = vxor.u32 %v823, 2147483648
  %v828 = vxor.u32 %v824, 2147483648
  %v829 = vxor.u32 %v825, 2147483648
  %v830 = vmul.f32 %v827, 1.442695
  %v831 = vpow.pop %v830
  %v832 = vmul.f32 %v828, 1.442695
  %v833 = vpow.pop %v832
  %v834 = vmul.f32 %v829, 1.442695
  %v835 = vpow.pop %v834
  %v836 = vadd.f32 %v831, 1.0
  %v837 = vadd.f32 %v833, 1.0
  %v838 = vadd.f32 %v835, 1.0
  %v839 = vrcp.pop %v836
  %v840 = vmul.f32 1.0, %v839
  %v841 = vrcp.pop %v837
  %v842 = vmul.f32 1.0, %v841
  %v843 = vrcp.pop %v838
  %v844 = vmul.f32 1.0, %v843
  %v845 = vtanh.pop %v826
  %v846 = vmul.f32 %v842, %v737
  %v847 = vmul.f32 %v840, %v845
  %v848 = vadd.f32 %v846, %v847
  %v849 = vtanh.pop %v848
  %v850 = vmul.f32 %v844, %v849
  %v851 = vpack.c.bf16 %v850, %v850
  %852 = vmatprep.subr.bf16.mxu0 %v567
  %853 = vmatpush1.bf16.msra.mxu0 %v566
  %854 = vmatprep.subr.bf16.mxu0 %v571
  %855 = vmatpush1.bf16.msra.mxu0 %v570
  %856 = vmatprep.subr.bf16.mxu0 %v575
  %857 = vmatpush1.bf16.msra.mxu0 %v574
  %858 = vmatprep.subr.bf16.mxu0 %v579
  %859 = vmatpush1.bf16.msra.mxu0 %v578
  %860 = vmatprep.subr.bf16.mxu0 %v583
  %861 = vmatpush1.bf16.msra.mxu0 %v582
  %862 = vmatprep.subr.bf16.mxu0 %v587
  %863 = vmatpush1.bf16.msra.mxu0 %v586
  %864 = vmatprep.subr.bf16.mxu0 %v591
  %865 = vmatpush1.bf16.msra.mxu0 %v590
  %866 = vmatprep.subr.bf16.mxu0 %v595
  %867 = vmatpush1.bf16.msra.mxu0 %v594
  %868 = vmatprep.subr.bf16.mxu0 0
  %869 = vmatpush1.bf16.msra.mxu0 0
  %870 = vmatprep.subr.bf16.mxu0 0
  %871 = vmatpush1.bf16.msra.mxu0 0
  %872 = vmatprep.subr.bf16.mxu0 0
  %873 = vmatpush1.bf16.msra.mxu0 0
  %874 = vmatprep.subr.bf16.mxu0 0
  %875 = vmatpush1.bf16.msra.mxu0 0
  %876 = vmatprep.subr.bf16.mxu0 0
  %877 = vmatpush1.bf16.msra.mxu0 0
  %878 = vmatprep.subr.bf16.mxu0 0
  %879 = vmatpush1.bf16.msra.mxu0 0
  %880 = vmatprep.subr.bf16.mxu0 0
  %881 = vmatpush1.bf16.msra.mxu0 0
  %882 = vmatprep.subr.bf16.mxu0 0
  %883 = vmatpush1.bf16.msra.mxu0 0
  %884 = vmatprep.mubr.bf16.mxu0 0
  %885 = vmatmul.mubr.bf16.gmra.mrb[0].mxu0 %v851
  %v886 = vpop.f32.mrb[0].mxu0
  %v887 = vadd.f32 0.0, %v886
  %v888 = vpop.f32.mrb[0].mxu0
  %v889 = vadd.f32 0.0, %v888
  %v890 = vpop.f32.mrb[0].mxu0
  %v891 = vpop.f32.mrb[0].mxu0
  %892 = vdwg.mxu0
  %893 = vmatprep.subr.bf16.mxu0 %v569
  %894 = vmatpush1.bf16.msra.mxu0 %v568
  %895 = vmatprep.subr.bf16.mxu0 %v573
  %896 = vmatpush1.bf16.msra.mxu0 %v572
  %897 = vmatprep.subr.bf16.mxu0 %v577
  %898 = vmatpush1.bf16.msra.mxu0 %v576
  %899 = vmatprep.subr.bf16.mxu0 %v581
  %900 = vmatpush1.bf16.msra.mxu0 %v580
  %901 = vmatprep.subr.bf16.mxu0 %v585
  %902 = vmatpush1.bf16.msra.mxu0 %v584
  %903 = vmatprep.subr.bf16.mxu0 %v589
  %904 = vmatpush1.bf16.msra.mxu0 %v588
  %905 = vmatprep.subr.bf16.mxu0 %v593
  %906 = vmatpush1.bf16.msra.mxu0 %v592
  %907 = vmatprep.subr.bf16.mxu0 %v597
  %908 = vmatpush1.bf16.msra.mxu0 %v596
  %909 = vmatprep.subr.bf16.mxu0 0
  %910 = vmatpush1.bf16.msra.mxu0 0
  %911 = vmatprep.subr.bf16.mxu0 0
  %912 = vmatpush1.bf16.msra.mxu0 0
  %913 = vmatprep.subr.bf16.mxu0 0
  %914 = vmatpush1.bf16.msra.mxu0 0
  %915 = vmatprep.subr.bf16.mxu0 0
  %916 = vmatpush1.bf16.msra.mxu0 0
  %917 = vmatprep.subr.bf16.mxu0 0
  %918 = vmatpush1.bf16.msra.mxu0 0
  %919 = vmatprep.subr.bf16.mxu0 0
  %920 = vmatpush1.bf16.msra.mxu0 0
  %921 = vmatprep.subr.bf16.mxu0 0
  %922 = vmatpush1.bf16.msra.mxu0 0
  %923 = vmatprep.subr.bf16.mxu0 0
  %924 = vmatpush1.bf16.msra.mxu0 0
  %925 = vmatprep.mubr.bf16.mxu0 0
  %926 = vmatmul.mubr.bf16.gmra.mrb[0].mxu0 %v851
  %v927 = vpop.f32.mrb[0].mxu0
  %v928 = vadd.f32 0.0, %v927
  %v929 = vpop.f32.mrb[0].mxu0
  %v930 = vadd.f32 0.0, %v929
  %v931 = vpop.f32.mrb[0].mxu0
  %v932 = vpop.f32.mrb[0].mxu0
  %933 = vdwg.mxu0
  %v934 = vadd.f32 %v337, %v887
  %v935 = vadd.f32 %v339, %v889
  %v936 = vadd.f32 %v410, %v928
  %v937 = vadd.f32 %v412, %v930
  %v938 = vxor.u32 %v934, 2147483648
  %v939 = vxor.u32 %v935, 2147483648
  %v940 = vxor.u32 %v936, 2147483648
  %v941 = vmul.f32 %v938, 1.442695
  %v942 = vpow.pop %v941
  %v943 = vmul.f32 %v939, 1.442695
  %v944 = vpow.pop %v943
  %v945 = vmul.f32 %v940, 1.442695
  %v946 = vpow.pop %v945
  %v947 = vadd.f32 %v942, 1.0
  %v948 = vadd.f32 %v944, 1.0
  %v949 = vadd.f32 %v946, 1.0
  %v950 = vrcp.pop %v947
  %v951 = vmul.f32 1.0, %v950
  %v952 = vrcp.pop %v948
  %v953 = vmul.f32 1.0, %v952
  %v954 = vrcp.pop %v949
  %v955 = vmul.f32 1.0, %v954
  %v956 = vtanh.pop %v937
  %v957 = vmul.f32 %v953, %v848
  %v958 = vmul.f32 %v951, %v956
  %v959 = vadd.f32 %v957, %v958
  %v960 = vtanh.pop %v959
  %v961 = vmul.f32 %v955, %v960
  %v962 = vpack.c.bf16 %v961, %v961
  %963 = vmatprep.subr.bf16.mxu0 %v567
  %964 = vmatpush1.bf16.msra.mxu0 %v566
  %965 = vmatprep.subr.bf16.mxu0 %v571
  %966 = vmatpush1.bf16.msra.mxu0 %v570
  %967 = vmatprep.subr.bf16.mxu0 %v575
  %968 = vmatpush1.bf16.msra.mxu0 %v574
  %969 = vmatprep.subr.bf16.mxu0 %v579
  %970 = vmatpush1.bf16.msra.mxu0 %v578
  %971 = vmatprep.subr.bf16.mxu0 %v583
  %972 = vmatpush1.bf16.msra.mxu0 %v582
  %973 = vmatprep.subr.bf16.mxu0 %v587
  %974 = vmatpush1.bf16.msra.mxu0 %v586
  %975 = vmatprep.subr.bf16.mxu0 %v591
  %976 = vmatpush1.bf16.msra.mxu0 %v590
  %977 = vmatprep.subr.bf16.mxu0 %v595
  %978 = vmatpush1.bf16.msra.mxu0 %v594
  %979 = vmatprep.subr.bf16.mxu0 0
  %980 = vmatpush1.bf16.msra.mxu0 0
  %981 = vmatprep.subr.bf16.mxu0 0
  %982 = vmatpush1.bf16.msra.mxu0 0
  %983 = vmatprep.subr.bf16.mxu0 0
  %984 = vmatpush1.bf16.msra.mxu0 0
  %985 = vmatprep.subr.bf16.mxu0 0
  %986 = vmatpush1.bf16.msra.mxu0 0
  %987 = vmatprep.subr.bf16.mxu0 0
  %988 = vmatpush1.bf16.msra.mxu0 0
  %989 = vmatprep.subr.bf16.mxu0 0
  %990 = vmatpush1.bf16.msra.mxu0 0
  %991 = vmatprep.subr.bf16.mxu0 0
  %992 = vmatpush1.bf16.msra.mxu0 0
  %993 = vmatprep.subr.bf16.mxu0 0
  %994 = vmatpush1.bf16.msra.mxu0 0
  %995 = vmatprep.mubr.bf16.mxu0 0
  %996 = vmatmul.mubr.bf16.gmra.mrb[0].mxu0 %v962
  %v997 = vpop.f32.mrb[0].mxu0
  %v998 = vadd.f32 0.0, %v997
  %v999 = vpop.f32.mrb[0].mxu0
  %v1000 = vadd.f32 0.0, %v999
  %v1001 = vpop.f32.mrb[0].mxu0
  %v1002 = vpop.f32.mrb[0].mxu0
  %1003 = vdwg.mxu0
  %1004 = vmatprep.subr.bf16.mxu0 %v569
  %1005 = vmatpush1.bf16.msra.mxu0 %v568
  %1006 = vmatprep.subr.bf16.mxu0 %v573
  %1007 = vmatpush1.bf16.msra.mxu0 %v572
  %1008 = vmatprep.subr.bf16.mxu0 %v577
  %1009 = vmatpush1.bf16.msra.mxu0 %v576
  %1010 = vmatprep.subr.bf16.mxu0 %v581
  %1011 = vmatpush1.bf16.msra.mxu0 %v580
  %1012 = vmatprep.subr.bf16.mxu0 %v585
  %1013 = vmatpush1.bf16.msra.mxu0 %v584
  %1014 = vmatprep.subr.bf16.mxu0 %v589
  %1015 = vmatpush1.bf16.msra.mxu0 %v588
  %1016 = vmatprep.subr.bf16.mxu0 %v593
  %1017 = vmatpush1.bf16.msra.mxu0 %v592
  %1018 = vmatprep.subr.bf16.mxu0 %v597
  %1019 = vmatpush1.bf16.msra.mxu0 %v596
  %1020 = vmatprep.subr.bf16.mxu0 0
  %1021 = vmatpush1.bf16.msra.mxu0 0
  %1022 = vmatprep.subr.bf16.mxu0 0
  %1023 = vmatpush1.bf16.msra.mxu0 0
  %1024 = vmatprep.subr.bf16.mxu0 0
  %1025 = vmatpush1.bf16.msra.mxu0 0
  %1026 = vmatprep.subr.bf16.mxu0 0
  %1027 = vmatpush1.bf16.msra.mxu0 0
  %1028 = vmatprep.subr.bf16.mxu0 0
  %1029 = vmatpush1.bf16.msra.mxu0 0
  %1030 = vmatprep.subr.bf16.mxu0 0
  %1031 = vmatpush1.bf16.msra.mxu0 0
  %1032 = vmatprep.subr.bf16.mxu0 0
  %1033 = vmatpush1.bf16.msra.mxu0 0
  %1034 = vmatprep.subr.bf16.mxu0 0
  %1035 = vmatpush1.bf16.msra.mxu0 0
  %1036 = vmatprep.mubr.bf16.mxu0 0
  %1037 = vmatmul.mubr.bf16.gmra.mrb[0].mxu0 %v962
  %v1038 = vpop.f32.mrb[0].mxu0
  %v1039 = vadd.f32 0.0, %v1038
  %v1040 = vpop.f32.mrb[0].mxu0
  %v1041 = vadd.f32 0.0, %v1040
  %v1042 = vpop.f32.mrb[0].mxu0
  %v1043 = vpop.f32.mrb[0].mxu0
  %1044 = vdwg.mxu0
  %v1045 = vadd.f32 %v341, %v998
  %v1046 = vadd.f32 %v343, %v1000
  %v1047 = vadd.f32 %v414, %v1039
  %v1048 = vadd.f32 %v416, %v1041
  %v1049 = vxor.u32 %v1045, 2147483648
  %v1050 = vxor.u32 %v1046, 2147483648
  %v1051 = vxor.u32 %v1047, 2147483648
  %v1052 = vmul.f32 %v1049, 1.442695
  %v1053 = vpow.pop %v1052
  %v1054 = vmul.f32 %v1050, 1.442695
  %v1055 = vpow.pop %v1054
  %v1056 = vmul.f32 %v1051, 1.442695
  %v1057 = vpow.pop %v1056
  %v1058 = vadd.f32 %v1053, 1.0
  %v1059 = vadd.f32 %v1055, 1.0
  %v1060 = vadd.f32 %v1057, 1.0
  %v1061 = vrcp.pop %v1058
  %v1062 = vmul.f32 1.0, %v1061
  %v1063 = vrcp.pop %v1059
  %v1064 = vmul.f32 1.0, %v1063
  %v1065 = vrcp.pop %v1060
  %v1066 = vmul.f32 1.0, %v1065
  %v1067 = vtanh.pop %v1048
  %v1068 = vmul.f32 %v1064, %v959
  %v1069 = vmul.f32 %v1062, %v1067
  %v1070 = vadd.f32 %v1068, %v1069
  %v1071 = vtanh.pop %v1070
  %v1072 = vmul.f32 %v1066, %v1071
  %v1073 = vpack.c.bf16 %v1072, %v1072
  %1074 = vmatprep.subr.bf16.mxu0 %v567
  %1075 = vmatpush1.bf16.msra.mxu0 %v566
  %1076 = vmatprep.subr.bf16.mxu0 %v571
  %1077 = vmatpush1.bf16.msra.mxu0 %v570
  %1078 = vmatprep.subr.bf16.mxu0 %v575
  %1079 = vmatpush1.bf16.msra.mxu0 %v574
  %1080 = vmatprep.subr.bf16.mxu0 %v579
  %1081 = vmatpush1.bf16.msra.mxu0 %v578
  %1082 = vmatprep.subr.bf16.mxu0 %v583
  %1083 = vmatpush1.bf16.msra.mxu0 %v582
  %1084 = vmatprep.subr.bf16.mxu0 %v587
  %1085 = vmatpush1.bf16.msra.mxu0 %v586
  %1086 = vmatprep.subr.bf16.mxu0 %v591
  %1087 = vmatpush1.bf16.msra.mxu0 %v590
  %1088 = vmatprep.subr.bf16.mxu0 %v595
  %1089 = vmatpush1.bf16.msra.mxu0 %v594
  %1090 = vmatprep.subr.bf16.mxu0 0
  %1091 = vmatpush1.bf16.msra.mxu0 0
  %1092 = vmatprep.subr.bf16.mxu0 0
  %1093 = vmatpush1.bf16.msra.mxu0 0
  %1094 = vmatprep.subr.bf16.mxu0 0
  %1095 = vmatpush1.bf16.msra.mxu0 0
  %1096 = vmatprep.subr.bf16.mxu0 0
  %1097 = vmatpush1.bf16.msra.mxu0 0
  %1098 = vmatprep.subr.bf16.mxu0 0
  %1099 = vmatpush1.bf16.msra.mxu0 0
  %1100 = vmatprep.subr.bf16.mxu0 0
  %1101 = vmatpush1.bf16.msra.mxu0 0
  %1102 = vmatprep.subr.bf16.mxu0 0
  %1103 = vmatpush1.bf16.msra.mxu0 0
  %1104 = vmatprep.subr.bf16.mxu0 0
  %1105 = vmatpush1.bf16.msra.mxu0 0
  %1106 = vmatprep.mubr.bf16.mxu0 0
  %1107 = vmatmul.mubr.bf16.gmra.mrb[0].mxu0 %v1073
  %v1108 = vpop.f32.mrb[0].mxu0
  %v1109 = vadd.f32 0.0, %v1108
  %v1110 = vpop.f32.mrb[0].mxu0
  %v1111 = vadd.f32 0.0, %v1110
  %v1112 = vpop.f32.mrb[0].mxu0
  %v1113 = vpop.f32.mrb[0].mxu0
  %1114 = vdwg.mxu0
  %1115 = vmatprep.subr.bf16.mxu0 %v569
  %1116 = vmatpush1.bf16.msra.mxu0 %v568
  %1117 = vmatprep.subr.bf16.mxu0 %v573
  %1118 = vmatpush1.bf16.msra.mxu0 %v572
  %1119 = vmatprep.subr.bf16.mxu0 %v577
  %1120 = vmatpush1.bf16.msra.mxu0 %v576
  %1121 = vmatprep.subr.bf16.mxu0 %v581
  %1122 = vmatpush1.bf16.msra.mxu0 %v580
  %1123 = vmatprep.subr.bf16.mxu0 %v585
  %1124 = vmatpush1.bf16.msra.mxu0 %v584
  %1125 = vmatprep.subr.bf16.mxu0 %v589
  %1126 = vmatpush1.bf16.msra.mxu0 %v588
  %1127 = vmatprep.subr.bf16.mxu0 %v593
  %1128 = vmatpush1.bf16.msra.mxu0 %v592
  %1129 = vmatprep.subr.bf16.mxu0 %v597
  %1130 = vmatpush1.bf16.msra.mxu0 %v596
  %1131 = vmatprep.subr.bf16.mxu0 0
  %1132 = vmatpush1.bf16.msra.mxu0 0
  %1133 = vmatprep.subr.bf16.mxu0 0
  %1134 = vmatpush1.bf16.msra.mxu0 0
  %1135 = vmatprep.subr.bf16.mxu0 0
  %1136 = vmatpush1.bf16.msra.mxu0 0
  %1137 = vmatprep.subr.bf16.mxu0 0
  %1138 = vmatpush1.bf16.msra.mxu0 0
  %1139 = vmatprep.subr.bf16.mxu0 0
  %1140 = vmatpush1.bf16.msra.mxu0 0
  %1141 = vmatprep.subr.bf16.mxu0 0
  %1142 = vmatpush1.bf16.msra.mxu0 0
  %1143 = vmatprep.subr.bf16.mxu0 0
  %1144 = vmatpush1.bf16.msra.mxu0 0
  %1145 = vmatprep.subr.bf16.mxu0 0
  %1146 = vmatpush1.bf16.msra.mxu0 0
  %1147 = vmatprep.mubr.bf16.mxu0 0
  %1148 = vmatmul.mubr.bf16.gmra.mrb[0].mxu0 %v1073
  %v1149 = vpop.f32.mrb[0].mxu0
  %v1150 = vadd.f32 0.0, %v1149
  %v1151 = vpop.f32.mrb[0].mxu0
  %v1152 = vadd.f32 0.0, %v1151
  %v1153 = vpop.f32.mrb[0].mxu0
  %v1154 = vpop.f32.mrb[0].mxu0
  %1155 = vdwg.mxu0
  %v1156 = vadd.f32 %v347, %v1109
  %v1157 = vadd.f32 %v349, %v1111
  %v1158 = vadd.f32 %v420, %v1150
  %v1159 = vadd.f32 %v422, %v1152
  %v1160 = vxor.u32 %v1156, 2147483648
  %v1161 = vxor.u32 %v1157, 2147483648
  %v1162 = vxor.u32 %v1158, 2147483648
  %v1163 = vmul.f32 %v1160, 1.442695
  %v1164 = vpow.pop %v1163
  %v1165 = vmul.f32 %v1161, 1.442695
  %v1166 = vpow.pop %v1165
  %v1167 = vmul.f32 %v1162, 1.442695
  %v1168 = vpow.pop %v1167
  %v1169 = vadd.f32 %v1164, 1.0
  %v1170 = vadd.f32 %v1166, 1.0
  %v1171 = vadd.f32 %v1168, 1.0
  %v1172 = vrcp.pop %v1169
  %v1173 = vmul.f32 1.0, %v1172
  %v1174 = vrcp.pop %v1170
  %v1175 = vmul.f32 1.0, %v1174
  %v1176 = vrcp.pop %v1171
  %v1177 = vmul.f32 1.0, %v1176
  %v1178 = vtanh.pop %v1159
  %v1179 = vmul.f32 %v1175, %v1070
  %v1180 = vmul.f32 %v1173, %v1178
  %v1181 = vadd.f32 %v1179, %v1180
  %v1182 = vtanh.pop %v1181
  %v1183 = vmul.f32 %v1177, %v1182
  %v1184 = vpack.c.bf16 %v1183, %v1183
  %1185 = vmatprep.subr.bf16.mxu0 %v567
  %1186 = vmatpush1.bf16.msra.mxu0 %v566
  %1187 = vmatprep.subr.bf16.mxu0 %v571
  %1188 = vmatpush1.bf16.msra.mxu0 %v570
  %1189 = vmatprep.subr.bf16.mxu0 %v575
  %1190 = vmatpush1.bf16.msra.mxu0 %v574
  %1191 = vmatprep.subr.bf16.mxu0 %v579
  %1192 = vmatpush1.bf16.msra.mxu0 %v578
  %1193 = vmatprep.subr.bf16.mxu0 %v583
  %1194 = vmatpush1.bf16.msra.mxu0 %v582
  %1195 = vmatprep.subr.bf16.mxu0 %v587
  %1196 = vmatpush1.bf16.msra.mxu0 %v586
  %1197 = vmatprep.subr.bf16.mxu0 %v591
  %1198 = vmatpush1.bf16.msra.mxu0 %v590
  %1199 = vmatprep.subr.bf16.mxu0 %v595
  %1200 = vmatpush1.bf16.msra.mxu0 %v594
  %1201 = vmatprep.subr.bf16.mxu0 0
  %1202 = vmatpush1.bf16.msra.mxu0 0
  %1203 = vmatprep.subr.bf16.mxu0 0
  %1204 = vmatpush1.bf16.msra.mxu0 0
  %1205 = vmatprep.subr.bf16.mxu0 0
  %1206 = vmatpush1.bf16.msra.mxu0 0
  %1207 = vmatprep.subr.bf16.mxu0 0
  %1208 = vmatpush1.bf16.msra.mxu0 0
  %1209 = vmatprep.subr.bf16.mxu0 0
  %1210 = vmatpush1.bf16.msra.mxu0 0
  %1211 = vmatprep.subr.bf16.mxu0 0
  %1212 = vmatpush1.bf16.msra.mxu0 0
  %1213 = vmatprep.subr.bf16.mxu0 0
  %1214 = vmatpush1.bf16.msra.mxu0 0
  %1215 = vmatprep.subr.bf16.mxu0 0
  %1216 = vmatpush1.bf16.msra.mxu0 0
  %1217 = vmatprep.mubr.bf16.mxu0 0
  %1218 = vmatmul.mubr.bf16.gmra.mrb[0].mxu0 %v1184
  %v1219 = vpop.f32.mrb[0].mxu0
  %v1220 = vadd.f32 0.0, %v1219
  %v1221 = vpop.f32.mrb[0].mxu0
  %v1222 = vadd.f32 0.0, %v1221
  %v1223 = vpop.f32.mrb[0].mxu0
  %v1224 = vpop.f32.mrb[0].mxu0
  %1225 = vdwg.mxu0
  %1226 = vmatprep.subr.bf16.mxu0 %v569
  %1227 = vmatpush1.bf16.msra.mxu0 %v568
  %1228 = vmatprep.subr.bf16.mxu0 %v573
  %1229 = vmatpush1.bf16.msra.mxu0 %v572
  %1230 = vmatprep.subr.bf16.mxu0 %v577
  %1231 = vmatpush1.bf16.msra.mxu0 %v576
  %1232 = vmatprep.subr.bf16.mxu0 %v581
  %1233 = vmatpush1.bf16.msra.mxu0 %v580
  %1234 = vmatprep.subr.bf16.mxu0 %v585
  %1235 = vmatpush1.bf16.msra.mxu0 %v584
  %1236 = vmatprep.subr.bf16.mxu0 %v589
  %1237 = vmatpush1.bf16.msra.mxu0 %v588
  %1238 = vmatprep.subr.bf16.mxu0 %v593
  %1239 = vmatpush1.bf16.msra.mxu0 %v592
  %1240 = vmatprep.subr.bf16.mxu0 %v597
  %1241 = vmatpush1.bf16.msra.mxu0 %v596
  %1242 = vmatprep.subr.bf16.mxu0 0
  %1243 = vmatpush1.bf16.msra.mxu0 0
  %1244 = vmatprep.subr.bf16.mxu0 0
  %1245 = vmatpush1.bf16.msra.mxu0 0
  %1246 = vmatprep.subr.bf16.mxu0 0
  %1247 = vmatpush1.bf16.msra.mxu0 0
  %1248 = vmatprep.subr.bf16.mxu0 0
  %1249 = vmatpush1.bf16.msra.mxu0 0
  %1250 = vmatprep.subr.bf16.mxu0 0
  %1251 = vmatpush1.bf16.msra.mxu0 0
  %1252 = vmatprep.subr.bf16.mxu0 0
  %1253 = vmatpush1.bf16.msra.mxu0 0
  %1254 = vmatprep.subr.bf16.mxu0 0
  %1255 = vmatpush1.bf16.msra.mxu0 0
  %1256 = vmatprep.subr.bf16.mxu0 0
  %1257 = vmatpush1.bf16.msra.mxu0 0
  %1258 = vmatprep.mubr.bf16.mxu0 0
  %1259 = vmatmul.mubr.bf16.gmra.mrb[0].mxu0 %v1184
  %v1260 = vpop.f32.mrb[0].mxu0
  %v1261 = vadd.f32 0.0, %v1260
  %v1262 = vpop.f32.mrb[0].mxu0
  %v1263 = vadd.f32 0.0, %v1262
  %v1264 = vpop.f32.mrb[0].mxu0
  %v1265 = vpop.f32.mrb[0].mxu0
  %1266 = vdwg.mxu0
  %v1267 = vadd.f32 %v351, %v1220
  %v1268 = vadd.f32 %v353, %v1222
  %v1269 = vadd.f32 %v424, %v1261
  %v1270 = vadd.f32 %v426, %v1263
  %v1271 = vxor.u32 %v1267, 2147483648
  %v1272 = vxor.u32 %v1268, 2147483648
  %v1273 = vxor.u32 %v1269, 2147483648
  %v1274 = vmul.f32 %v1271, 1.442695
  %v1275 = vpow.pop %v1274
  %v1276 = vmul.f32 %v1272, 1.442695
  %v1277 = vpow.pop %v1276
  %v1278 = vmul.f32 %v1273, 1.442695
  %v1279 = vpow.pop %v1278
  %v1280 = vadd.f32 %v1275, 1.0
  %v1281 = vadd.f32 %v1277, 1.0
  %v1282 = vadd.f32 %v1279, 1.0
  %v1283 = vrcp.pop %v1280
  %v1284 = vmul.f32 1.0, %v1283
  %v1285 = vrcp.pop %v1281
  %v1286 = vmul.f32 1.0, %v1285
  %v1287 = vrcp.pop %v1282
  %v1288 = vmul.f32 1.0, %v1287
  %v1289 = vtanh.pop %v1270
  %v1290 = vmul.f32 %v1286, %v1181
  %v1291 = vmul.f32 %v1284, %v1289
  %v1292 = vadd.f32 %v1290, %v1291
  %v1293 = vtanh.pop %v1292
  %v1294 = vmul.f32 %v1288, %v1293
  %v1295 = vpack.c.bf16 %v1294, %v1294
  %1296 = vmatprep.subr.bf16.mxu0 %v567
  %1297 = vmatpush1.bf16.msra.mxu0 %v566
  %1298 = vmatprep.subr.bf16.mxu0 %v571
  %1299 = vmatpush1.bf16.msra.mxu0 %v570
  %1300 = vmatprep.subr.bf16.mxu0 %v575
  %1301 = vmatpush1.bf16.msra.mxu0 %v574
  %1302 = vmatprep.subr.bf16.mxu0 %v579
  %1303 = vmatpush1.bf16.msra.mxu0 %v578
  %1304 = vmatprep.subr.bf16.mxu0 %v583
  %1305 = vmatpush1.bf16.msra.mxu0 %v582
  %1306 = vmatprep.subr.bf16.mxu0 %v587
  %1307 = vmatpush1.bf16.msra.mxu0 %v586
  %1308 = vmatprep.subr.bf16.mxu0 %v591
  %1309 = vmatpush1.bf16.msra.mxu0 %v590
  %1310 = vmatprep.subr.bf16.mxu0 %v595
  %1311 = vmatpush1.bf16.msra.mxu0 %v594
  %1312 = vmatprep.subr.bf16.mxu0 0
  %1313 = vmatpush1.bf16.msra.mxu0 0
  %1314 = vmatprep.subr.bf16.mxu0 0
  %1315 = vmatpush1.bf16.msra.mxu0 0
  %1316 = vmatprep.subr.bf16.mxu0 0
  %1317 = vmatpush1.bf16.msra.mxu0 0
  %1318 = vmatprep.subr.bf16.mxu0 0
  %1319 = vmatpush1.bf16.msra.mxu0 0
  %1320 = vmatprep.subr.bf16.mxu0 0
  %1321 = vmatpush1.bf16.msra.mxu0 0
  %1322 = vmatprep.subr.bf16.mxu0 0
  %1323 = vmatpush1.bf16.msra.mxu0 0
  %1324 = vmatprep.subr.bf16.mxu0 0
  %1325 = vmatpush1.bf16.msra.mxu0 0
  %1326 = vmatprep.subr.bf16.mxu0 0
  %1327 = vmatpush1.bf16.msra.mxu0 0
  %1328 = vmatprep.mubr.bf16.mxu0 0
  %1329 = vmatmul.mubr.bf16.gmra.mrb[0].mxu0 %v1295
  %v1330 = vpop.f32.mrb[0].mxu0
  %v1331 = vadd.f32 0.0, %v1330
  %v1332 = vpop.f32.mrb[0].mxu0
  %v1333 = vadd.f32 0.0, %v1332
  %v1334 = vpop.f32.mrb[0].mxu0
  %v1335 = vpop.f32.mrb[0].mxu0
  %1336 = vdwg.mxu0
  %1337 = vmatprep.subr.bf16.mxu0 %v569
  %1338 = vmatpush1.bf16.msra.mxu0 %v568
  %1339 = vmatprep.subr.bf16.mxu0 %v573
  %1340 = vmatpush1.bf16.msra.mxu0 %v572
  %1341 = vmatprep.subr.bf16.mxu0 %v577
  %1342 = vmatpush1.bf16.msra.mxu0 %v576
  %1343 = vmatprep.subr.bf16.mxu0 %v581
  %1344 = vmatpush1.bf16.msra.mxu0 %v580
  %1345 = vmatprep.subr.bf16.mxu0 %v585
  %1346 = vmatpush1.bf16.msra.mxu0 %v584
  %1347 = vmatprep.subr.bf16.mxu0 %v589
  %1348 = vmatpush1.bf16.msra.mxu0 %v588
  %1349 = vmatprep.subr.bf16.mxu0 %v593
  %1350 = vmatpush1.bf16.msra.mxu0 %v592
  %1351 = vmatprep.subr.bf16.mxu0 %v597
  %1352 = vmatpush1.bf16.msra.mxu0 %v596
  %1353 = vmatprep.subr.bf16.mxu0 0
  %1354 = vmatpush1.bf16.msra.mxu0 0
  %1355 = vmatprep.subr.bf16.mxu0 0
  %1356 = vmatpush1.bf16.msra.mxu0 0
  %1357 = vmatprep.subr.bf16.mxu0 0
  %1358 = vmatpush1.bf16.msra.mxu0 0
  %1359 = vmatprep.subr.bf16.mxu0 0
  %1360 = vmatpush1.bf16.msra.mxu0 0
  %1361 = vmatprep.subr.bf16.mxu0 0
  %1362 = vmatpush1.bf16.msra.mxu0 0
  %1363 = vmatprep.subr.bf16.mxu0 0
  %1364 = vmatpush1.bf16.msra.mxu0 0
  %1365 = vmatprep.subr.bf16.mxu0 0
  %1366 = vmatpush1.bf16.msra.mxu0 0
  %1367 = vmatprep.subr.bf16.mxu0 0
  %1368 = vmatpush1.bf16.msra.mxu0 0
  %1369 = vmatprep.mubr.bf16.mxu0 0
  %1370 = vmatmul.mubr.bf16.gmra.mrb[0].mxu0 %v1295
  %v1371 = vpop.f32.mrb[0].mxu0
  %v1372 = vadd.f32 0.0, %v1371
  %v1373 = vpop.f32.mrb[0].mxu0
  %v1374 = vadd.f32 0.0, %v1373
  %v1375 = vpop.f32.mrb[0].mxu0
  %v1376 = vpop.f32.mrb[0].mxu0
  %1377 = vdwg.mxu0
  %v1378 = vadd.f32 %v357, %v1331
  %v1379 = vadd.f32 %v359, %v1333
  %v1380 = vadd.f32 %v430, %v1372
  %v1381 = vadd.f32 %v432, %v1374
  %v1382 = vxor.u32 %v1378, 2147483648
  %v1383 = vxor.u32 %v1379, 2147483648
  %v1384 = vxor.u32 %v1380, 2147483648
  %v1385 = vmul.f32 %v1382, 1.442695
  %v1386 = vpow.pop %v1385
  %v1387 = vmul.f32 %v1383, 1.442695
  %v1388 = vpow.pop %v1387
  %v1389 = vmul.f32 %v1384, 1.442695
  %v1390 = vpow.pop %v1389
  %v1391 = vadd.f32 %v1386, 1.0
  %v1392 = vadd.f32 %v1388, 1.0
  %v1393 = vadd.f32 %v1390, 1.0
  %v1394 = vrcp.pop %v1391
  %v1395 = vmul.f32 1.0, %v1394
  %v1396 = vrcp.pop %v1392
  %v1397 = vmul.f32 1.0, %v1396
  %v1398 = vrcp.pop %v1393
  %v1399 = vmul.f32 1.0, %v1398
  %v1400 = vtanh.pop %v1381
  %v1401 = vmul.f32 %v1397, %v1292
  %v1402 = vmul.f32 %v1395, %v1400
  %v1403 = vadd.f32 %v1401, %v1402
  %v1404 = vtanh.pop %v1403
  %v1405 = vmul.f32 %v1399, %v1404
  %v1406 = vpack.c.bf16 %v1405, %v1405
  %1407 = vmatprep.subr.bf16.mxu0 %v567
  %1408 = vmatpush1.bf16.msra.mxu0 %v566
  %1409 = vmatprep.subr.bf16.mxu0 %v571
  %1410 = vmatpush1.bf16.msra.mxu0 %v570
  %1411 = vmatprep.subr.bf16.mxu0 %v575
  %1412 = vmatpush1.bf16.msra.mxu0 %v574
  %1413 = vmatprep.subr.bf16.mxu0 %v579
  %1414 = vmatpush1.bf16.msra.mxu0 %v578
  %1415 = vmatprep.subr.bf16.mxu0 %v583
  %1416 = vmatpush1.bf16.msra.mxu0 %v582
  %1417 = vmatprep.subr.bf16.mxu0 %v587
  %1418 = vmatpush1.bf16.msra.mxu0 %v586
  %1419 = vmatprep.subr.bf16.mxu0 %v591
  %1420 = vmatpush1.bf16.msra.mxu0 %v590
  %1421 = vmatprep.subr.bf16.mxu0 %v595
  %1422 = vmatpush1.bf16.msra.mxu0 %v594
  %1423 = vmatprep.subr.bf16.mxu0 0
  %1424 = vmatpush1.bf16.msra.mxu0 0
  %1425 = vmatprep.subr.bf16.mxu0 0
  %1426 = vmatpush1.bf16.msra.mxu0 0
  %1427 = vmatprep.subr.bf16.mxu0 0
  %1428 = vmatpush1.bf16.msra.mxu0 0
  %1429 = vmatprep.subr.bf16.mxu0 0
  %1430 = vmatpush1.bf16.msra.mxu0 0
  %1431 = vmatprep.subr.bf16.mxu0 0
  %1432 = vmatpush1.bf16.msra.mxu0 0
  %1433 = vmatprep.subr.bf16.mxu0 0
  %1434 = vmatpush1.bf16.msra.mxu0 0
  %1435 = vmatprep.subr.bf16.mxu0 0
  %1436 = vmatpush1.bf16.msra.mxu0 0
  %1437 = vmatprep.subr.bf16.mxu0 0
  %1438 = vmatpush1.bf16.msra.mxu0 0
  %1439 = vmatprep.mubr.bf16.mxu0 0
  %1440 = vmatmul.mubr.bf16.gmra.mrb[0].mxu0 %v1406
  %v1441 = vpop.f32.mrb[0].mxu0
  %v1442 = vadd.f32 0.0, %v1441
  %v1443 = vpop.f32.mrb[0].mxu0
  %v1444 = vadd.f32 0.0, %v1443
  %v1445 = vpop.f32.mrb[0].mxu0
  %v1446 = vpop.f32.mrb[0].mxu0
  %1447 = vdwg.mxu0
  %1448 = vmatprep.subr.bf16.mxu0 %v569
  %1449 = vmatpush1.bf16.msra.mxu0 %v568
  %1450 = vmatprep.subr.bf16.mxu0 %v573
  %1451 = vmatpush1.bf16.msra.mxu0 %v572
  %1452 = vmatprep.subr.bf16.mxu0 %v577
  %1453 = vmatpush1.bf16.msra.mxu0 %v576
  %1454 = vmatprep.subr.bf16.mxu0 %v581
  %1455 = vmatpush1.bf16.msra.mxu0 %v580
  %1456 = vmatprep.subr.bf16.mxu0 %v585
  %1457 = vmatpush1.bf16.msra.mxu0 %v584
  %1458 = vmatprep.subr.bf16.mxu0 %v589
  %1459 = vmatpush1.bf16.msra.mxu0 %v588
  %1460 = vmatprep.subr.bf16.mxu0 %v593
  %1461 = vmatpush1.bf16.msra.mxu0 %v592
  %1462 = vmatprep.subr.bf16.mxu0 %v597
  %1463 = vmatpush1.bf16.msra.mxu0 %v596
  %1464 = vmatprep.subr.bf16.mxu0 0
  %1465 = vmatpush1.bf16.msra.mxu0 0
  %1466 = vmatprep.subr.bf16.mxu0 0
  %1467 = vmatpush1.bf16.msra.mxu0 0
  %1468 = vmatprep.subr.bf16.mxu0 0
  %1469 = vmatpush1.bf16.msra.mxu0 0
  %1470 = vmatprep.subr.bf16.mxu0 0
  %1471 = vmatpush1.bf16.msra.mxu0 0
  %1472 = vmatprep.subr.bf16.mxu0 0
  %1473 = vmatpush1.bf16.msra.mxu0 0
  %1474 = vmatprep.subr.bf16.mxu0 0
  %1475 = vmatpush1.bf16.msra.mxu0 0
  %1476 = vmatprep.subr.bf16.mxu0 0
  %1477 = vmatpush1.bf16.msra.mxu0 0
  %1478 = vmatprep.subr.bf16.mxu0 0
  %1479 = vmatpush1.bf16.msra.mxu0 0
  %1480 = vmatprep.mubr.bf16.mxu0 0
  %1481 = vmatmul.mubr.bf16.gmra.mrb[0].mxu0 %v1406
  %v1482 = vpop.f32.mrb[0].mxu0
  %v1483 = vadd.f32 0.0, %v1482
  %v1484 = vpop.f32.mrb[0].mxu0
  %v1485 = vadd.f32 0.0, %v1484
  %v1486 = vpop.f32.mrb[0].mxu0
  %v1487 = vpop.f32.mrb[0].mxu0
  %1488 = vdwg.mxu0
  %v1489 = vadd.f32 %v361, %v1442
  %v1490 = vadd.f32 %v363, %v1444
  %v1491 = vadd.f32 %v434, %v1483
  %v1492 = vadd.f32 %v436, %v1485
  %v1493 = vxor.u32 %v1489, 2147483648
  %v1494 = vxor.u32 %v1490, 2147483648
  %v1495 = vxor.u32 %v1491, 2147483648
  %v1496 = vmul.f32 %v1493, 1.442695
  %v1497 = vpow.pop %v1496
  %v1498 = vmul.f32 %v1494, 1.442695
  %v1499 = vpow.pop %v1498
  %v1500 = vmul.f32 %v1495, 1.442695
  %v1501 = vpow.pop %v1500
  %v1502 = vadd.f32 %v1497, 1.0
  %v1503 = vadd.f32 %v1499, 1.0
  %v1504 = vadd.f32 %v1501, 1.0
  %v1505 = vrcp.pop %v1502
  %v1506 = vmul.f32 1.0, %v1505
  %v1507 = vrcp.pop %v1503
  %v1508 = vmul.f32 1.0, %v1507
  %v1509 = vrcp.pop %v1504
  %v1510 = vmul.f32 1.0, %v1509
  %v1511 = vtanh.pop %v1492
  %v1512 = vmul.f32 %v1508, %v1403
  %v1513 = vmul.f32 %v1506, %v1511
  %v1514 = vadd.f32 %v1512, %v1513
  %v1515 = vtanh.pop %v1514
  %v1516 = vmul.f32 %v1510, %v1515
  %v1517 = vpack.c.bf16 %v1516, %v1516
  %v1518 = vld [vmem:[%s4] sm:$0xf]
  %v1519 = vld [vmem:[%s4 + $0x4] sm:$0xf]
  %v1520 = vld [vmem:[%s4 + $0x8] sm:$0xf]
  %v1521 = vld [vmem:[%s4 + $0xc] sm:$0xf]
  %v1522 = vld [vmem:[%s4 + $0x10] sm:$0xf]
  %v1523 = vld [vmem:[%s4 + $0x14] sm:$0xf]
  %v1524 = vld [vmem:[%s4 + $0x18] sm:$0xf]
  %v1525 = vld [vmem:[%s4 + $0x1c] sm:$0xf]
  %v1526 = vld [vmem:[%s4 + $0x20] sm:$0xf]
  %v1527 = vld [vmem:[%s4 + $0x24] sm:$0xf]
  %v1528 = vld [vmem:[%s4 + $0x28] sm:$0xf]
  %v1529 = vld [vmem:[%s4 + $0x2c] sm:$0xf]
  %v1530 = vld [vmem:[%s4 + $0x30] sm:$0xf]
  %v1531 = vld [vmem:[%s4 + $0x34] sm:$0xf]
  %v1532 = vld [vmem:[%s4 + $0x38] sm:$0xf]
  %v1533 = vld [vmem:[%s4 + $0x3c] sm:$0xf]
  %v1534 = vld [vmem:[%s5] sm:$0x1]
  %v1536 = vlaneseq
  %v1537 = vshrl.u32 %v1536, 7
  %v1538 = vsub.s32 0, %v1537
  %v1539 = vrot.slane %v1534, %v1538
  %v1557 = vunpack.c.l.b16 %v1518
  %v1558 = vunpack.c.l.b16 %v1519
  %v1559 = vunpack.c.l.b16 %v1520
  %v1560 = vunpack.c.l.b16 %v1521
  %v1561 = vunpack.c.l.b16 %v1522
  %v1562 = vunpack.c.l.b16 %v1523
  %v1563 = vunpack.c.l.b16 %v1524
  %v1564 = vunpack.c.l.b16 %v1525
  %v1565 = vunpack.c.l.b16 %v1526
  %v1566 = vunpack.c.l.b16 %v1527
  %v1567 = vunpack.c.l.b16 %v1528
  %v1568 = vunpack.c.l.b16 %v1529
  %v1569 = vunpack.c.l.b16 %v1530
  %v1570 = vunpack.c.l.b16 %v1531
  %v1571 = vunpack.c.l.b16 %v1532
  %v1572 = vunpack.c.l.b16 %v1533
  %v1573 = vpack.c.b16 %v1558, %v1557
  %v1574 = vpack.c.b16 %v1560, %v1559
  %v1575 = vpack.c.b16 %v1562, %v1561
  %v1576 = vpack.c.b16 %v1564, %v1563
  %v1577 = vpack.c.b16 %v1566, %v1565
  %v1578 = vpack.c.b16 %v1568, %v1567
  %v1579 = vpack.c.b16 %v1570, %v1569
  %v1580 = vpack.c.b16 %v1572, %v1571
  %1589 = vmatprep.subr.bf16.mxu0 0
  %1590 = vmatpush1.bf16.msra.mxu0 %v1573
  %1591 = vmatprep.subr.bf16.mxu0 0
  %1592 = vmatpush1.bf16.msra.mxu0 %v1574
  %1593 = vmatprep.subr.bf16.mxu0 0
  %1594 = vmatpush1.bf16.msra.mxu0 %v1575
  %1595 = vmatprep.subr.bf16.mxu0 0
  %1596 = vmatpush1.bf16.msra.mxu0 %v1576
  %1597 = vmatprep.subr.bf16.mxu0 0
  %1598 = vmatpush1.bf16.msra.mxu0 %v1577
  %1599 = vmatprep.subr.bf16.mxu0 0
  %1600 = vmatpush1.bf16.msra.mxu0 %v1578
  %1601 = vmatprep.subr.bf16.mxu0 0
  %1602 = vmatpush1.bf16.msra.mxu0 %v1579
  %1603 = vmatprep.subr.bf16.mxu0 0
  %1604 = vmatpush1.bf16.msra.mxu0 %v1580
  %1605 = vmatprep.subr.bf16.mxu0 0
  %1606 = vmatpush1.bf16.msra.mxu0 0
  %1607 = vmatprep.subr.bf16.mxu0 0
  %1608 = vmatpush1.bf16.msra.mxu0 0
  %1609 = vmatprep.subr.bf16.mxu0 0
  %1610 = vmatpush1.bf16.msra.mxu0 0
  %1611 = vmatprep.subr.bf16.mxu0 0
  %1612 = vmatpush1.bf16.msra.mxu0 0
  %1613 = vmatprep.subr.bf16.mxu0 0
  %1614 = vmatpush1.bf16.msra.mxu0 0
  %1615 = vmatprep.subr.bf16.mxu0 0
  %1616 = vmatpush1.bf16.msra.mxu0 0
  %1617 = vmatprep.subr.bf16.mxu0 0
  %1618 = vmatpush1.bf16.msra.mxu0 0
  %1619 = vmatprep.subr.bf16.mxu0 0
  %1620 = vmatpush1.bf16.msra.mxu0 0
  %1621 = vmatprep.mubr.bf16.mxu0 0
  %1622 = vmatmul.mubr.bf16.gmra.mrb[0].mxu0 %v1517
  %v1623 = vpop.f32.mrb[0].mxu0
  %v1624 = vadd.f32 %v1539, %v1623
  %v1625 = vpop.f32.mrb[0].mxu0
  %v1626 = vpop.f32.mrb[0].mxu0
  %v1627 = vpop.f32.mrb[0].mxu0
  %1628 = vdwg.mxu0
  %1629 = vst [vmem:[%s6] sm:$0xff] %v1624
  // Predicated region
  $region26: #{forward.1} parent=0 // pred_check
    _
  $region27: #{forward.1} parent=0 // pred_check_branch
    %1631 = sbr.rel (0) target = $region29
  $region28: #{forward.1} parent=0 // pred_region
    _
  $region29: #{forward.1} parent=0 // pred_fallthru
    _
  // Predicated region
  $region30: #{forward.1} parent=0 // pred_check
    _
  $region31: #{forward.1} parent=0 // pred_check_branch
    %1633 = sbr.rel (0) target = $region33
  $region32: #{forward.1} parent=0 // pred_region
    _
  $region33: #{forward.1} parent=0 // pred_fallthru
    _

</llo_original>
